<compile_context>
chip_gen: v5e
topology: v5e:2x2
jax: 0.10.0
libtpu: 0.0.40
codegen_flags: <defaults>
</compile_context>

<pallas_src>
import functools
import math

import jax
import jax.numpy as jnp
from jax import lax
from jax.experimental import pallas as pl
from jax.experimental.pallas import tpu as pltpu

_GELU_C = math.sqrt(2.0 / math.pi)
_GELU_K = 0.044715


def _round_up(n, m):
    return ((n + m - 1) // m) * m


def _cdiv(a, b):
    return (a + b - 1) // b


def _mxu_lane_target():
    """Lane-fold target: 256 on v6e/v7x-class chips (256-wide MXU), 128 otherwise."""
    try:
        kind = jax.devices()[0].device_kind.lower()
    except Exception:
        return 256
    for tag in ("v2", "v3", "v4", "v5"):
        if tag in kind:
            return 128
    return 256


def _pick_fold(E, target):
    for width in (target, 128):
        if E < width and width % E == 0:
            return width // E
    return 1


def ffn_kernel(x_ref, w1_ref, b1_ref, w2_ref, b2_ref, o_ref, *,
               chunk, n_chunks, compute_dtype):
    # Resident (constant index_map) operands: load once per grid step.
    w1 = w1_ref[...]                        # (EL, HL), compute_dtype
    w2 = w2_ref[...]                        # (HL, EL), compute_dtype
    b1 = b1_ref[...].astype(jnp.float32)    # (1, HL)
    b2 = b2_ref[...].astype(jnp.float32)    # (1, EL)

    c = jnp.asarray(_GELU_C, compute_dtype)
    k = jnp.asarray(_GELU_K, compute_dtype)
    half = jnp.asarray(0.5, compute_dtype)
    one = jnp.asarray(1.0, compute_dtype)

    def body(ci, carry):
        r0 = ci * chunk
        if not isinstance(r0, int):
            r0 = pl.multiple_of(r0, chunk)
        xk = x_ref[pl.ds(r0, chunk), :].astype(compute_dtype)

        # Linear 1 (MXU, f32 accumulation).
        h = jnp.dot(xk, w1, preferred_element_type=jnp.float32) + b1

        # tanh-approx GELU, factored to minimize VALU muls; tanh -> EUP.
        hc = h.astype(compute_dtype)
        t = jnp.tanh(c * (hc * (one + k * (hc * hc))))
        u = half * hc
        g = u + u * t                       # == 0.5*h*(1+tanh(...))

        # Linear 2 (MXU, f32 accumulation).
        o = jnp.dot(g.astype(compute_dtype), w2,
                    preferred_element_type=jnp.float32) + b2
        o_ref[pl.ds(r0, chunk), :] = o.astype(o_ref.dtype)
        return carry

    if n_chunks == 1:
        body(0, 0)
    else:
        lax.fori_loop(0, n_chunks, body, 0, unroll=n_chunks <= 8)


def feed_forward(x, w1, b1, w2, b2, *, tm=8192, chunk=256,
                 compute_dtype=jnp.bfloat16):
    """x: (B, S, E) f32.  w1: (E, H), b1: (H,), w2: (H, E), b2: (E,)."""
    B, S, E = x.shape
    H = w1.shape[1]
    M = B * S

    # Lane-fold factor (generation aware: EL=256 on v6e/v7x, EL=128 on v5e).
    fold = _pick_fold(E, _mxu_lane_target())
    EL, HL = fold * E, fold * H

    # Tiling: big DMA tiles, fixed-size inner chunks for the GELU intermediates.
    chunk = max(8, (chunk // 8) * 8)
    unit = 8 * fold                 # minimum logical-row granularity (sublane=8)
    big_unit = chunk * fold         # logical rows per inner chunk
    M_unit = _round_up(M, unit)
    if M_unit <= big_unit:
        tm = M_unit
        chunk_rows = tm // fold
        n_chunks = 1
    else:
        tm = max(big_unit, (tm // big_unit) * big_unit)
        # Keep >= 2 grid steps where possible so a megacore (v7x) can split work.
        tm = min(tm, _round_up(_cdiv(M_unit, 2), big_unit))
        chunk_rows = chunk
        n_chunks = (tm // fold) // chunk
    M_pad = _round_up(M_unit, tm)
    tm_ld = tm // fold

    x2 = x.reshape(M, E)
    if M_pad != M:
        x2 = jnp.pad(x2, ((0, M_pad - M), (0, 0)))
    x_ld = x2.reshape(M_pad // fold, EL)     # free, contiguous HBM reshape

    # Block-diagonal weights: block (j, j) holds W1 / W2; off-diagonal exact zeros.
    if fold > 1:
        eyef = jnp.eye(fold, dtype=w1.dtype)
        w1_blk = jnp.einsum("ab,eh->aebh", eyef, w1).reshape(EL, HL)
        w2_blk = jnp.einsum("ab,he->ahbe", eyef, w2).reshape(HL, EL)
        b1_blk = jnp.tile(b1.reshape(1, H), (1, fold))
        b2_blk = jnp.tile(b2.reshape(1, E), (1, fold))
    else:
        w1_blk, w2_blk = w1, w2
        b1_blk, b2_blk = b1.reshape(1, H), b2.reshape(1, E)
    # Pre-cast matmul weights to the compute dtype (biases stay f32).
    w1_blk = w1_blk.astype(compute_dtype)
    w2_blk = w2_blk.astype(compute_dtype)

    kernel = functools.partial(ffn_kernel, chunk=chunk_rows,
                               n_chunks=n_chunks, compute_dtype=compute_dtype)

    out_ld = pl.pallas_call(
        kernel,
        out_shape=jax.ShapeDtypeStruct((M_pad // fold, EL), x.dtype),
        grid_spec=pltpu.PrefetchScalarGridSpec(
            num_scalar_prefetch=0,
            grid=(M_pad // tm,),
            in_specs=[
                pl.BlockSpec((tm_ld, EL), lambda i: (i, 0)),  # x tile (lane-dense)
                pl.BlockSpec((EL, HL), lambda i: (0, 0)),     # W1 block-diag (resident)
                pl.BlockSpec((1, HL), lambda i: (0, 0)),      # b1 (resident)
                pl.BlockSpec((HL, EL), lambda i: (0, 0)),     # W2 block-diag (resident)
                pl.BlockSpec((1, EL), lambda i: (0, 0)),      # b2 (resident)
            ],
            out_specs=pl.BlockSpec((tm_ld, EL), lambda i: (i, 0)),
        ),
        compiler_params=pltpu.CompilerParams(
            dimension_semantics=("parallel",),
            vmem_limit_bytes=32 * 1024 * 1024,
        ),
    )(x_ld, w1_blk, b1_blk, w2_blk, b2_blk)

    out = out_ld.reshape(M_pad, E)[:M]
    return out.reshape(B, S, E)


def feed_forward_ref(x, w1, b1, w2, b2):
    h = jnp.einsum("bse,eh->bsh", x, w1, precision=lax.Precision.HIGHEST) + b1
    c = jnp.sqrt(2.0 / jnp.pi)
    g = 0.5 * h * (1.0 + jnp.tanh(c * (h + 0.044715 * h ** 3)))
    return jnp.einsum("bsh,he->bse", g, w2, precision=lax.Precision.HIGHEST) + b2


def _make_params(key, E, H):
    kw1, kb1, kw2, kb2 = jax.random.split(key, 4)
    bound1 = 1.0 / math.sqrt(E)
    w1 = jax.random.uniform(kw1, (E, H), minval=-bound1, maxval=bound1, dtype=jnp.float32)
    b1 = jax.random.uniform(kb1, (H,), minval=-bound1, maxval=bound1, dtype=jnp.float32)
    bound2 = 1.0 / math.sqrt(H)
    w2 = jax.random.uniform(kw2, (H, E), minval=-bound2, maxval=bound2, dtype=jnp.float32)
    b2 = jax.random.uniform(kb2, (E,), minval=-bound2, maxval=bound2, dtype=jnp.float32)
    return w1, b1, w2, b2


if __name__ == "__main__":
    # Shapes consistent with the module: embeddingDimension=32, expansion=4.
    E = 32
    H = 4 * E

    key = jax.random.PRNGKey(0)
    kx1, kx2, kp = jax.random.split(key, 3)
    w1, b1, w2, b2 = _make_params(kp, E, H)

    # Small case (single grid step, single inner chunk).
    B, S = 2, 8
    x = jax.random.normal(kx1, (B, S, E), dtype=jnp.float32)
    ref = feed_forward_ref(x, w1, b1, w2, b2)

    # Full-f32 mode: proves lane-folding / block-diag / padding are exact.
    out_f32 = jax.block_until_ready(
        feed_forward(x, w1, b1, w2, b2, compute_dtype=jnp.float32))
    assert out_f32.shape == (B, S, E)
    assert jnp.allclose(out_f32, ref, atol=1e-4, rtol=1e-3), "f32 kernel mismatch"

    # Default (bf16 operands + bf16 GELU, f32 accumulation): relaxed tolerance.
    out_bf16 = jax.block_until_ready(feed_forward(x, w1, b1, w2, b2))
    assert jnp.allclose(out_bf16, ref, atol=3e-2, rtol=3e-2), "bf16 kernel mismatch"

    # Larger case: exercises padding, multi-step grid, and the inner chunk loop.
    B2, S2 = 4, 2047
    x_big = jax.random.normal(kx2, (B2, S2, E), dtype=jnp.float32)
    ref_big = feed_forward_ref(x_big, w1, b1, w2, b2)
    out_big = jax.block_until_ready(feed_forward(x_big, w1, b1, w2, b2))
    assert out_big.shape == (B2, S2, E)
    assert jnp.allclose(out_big, ref_big, atol=3e-2, rtol=3e-2), "bf16 kernel mismatch (big)"

    print("KERNEL_OK")
</pallas_src>

<mosaic_0001>
module attributes {stable_mosaic.version = 11 : i64} {
  func.func @ffn_kernel(%arg0: i32, %arg1: memref<8x256xf32, #tpu.memory_space<vmem>>, %arg2: memref<256x1024xf32, #tpu.memory_space<vmem>>, %arg3: memref<1x1024xf32, #tpu.memory_space<vmem>>, %arg4: memref<1024x256xf32, #tpu.memory_space<vmem>>, %arg5: memref<1x256xf32, #tpu.memory_space<vmem>>, %arg6: memref<8x256xf32, #tpu.memory_space<vmem>>) attributes {dimension_semantics = [#tpu.dimension_semantics<parallel>], iteration_bounds = array<i64: 1>, scalar_prefetch = 0 : i64, scratch_operands = 0 : i64, tpu.core_type = #tpu.core_type<tc>, window_params = [{transform_indices = @transform_0, window_bounds = array<i64: 8, 256>}, {pipeline_mode = #tpu.pipeline_mode<synchronous>, transform_indices = @transform_1, window_bounds = array<i64: 256, 1024>}, {pipeline_mode = #tpu.pipeline_mode<synchronous>, transform_indices = @transform_2, window_bounds = array<i64: 1, 1024>}, {pipeline_mode = #tpu.pipeline_mode<synchronous>, transform_indices = @transform_3, window_bounds = array<i64: 1024, 256>}, {pipeline_mode = #tpu.pipeline_mode<synchronous>, transform_indices = @transform_4, window_bounds = array<i64: 1, 256>}, {transform_indices = @transform_5, window_bounds = array<i64: 8, 256>}]} {
    %c0 = arith.constant 0 : index
    %c0_0 = arith.constant 0 : index
    %0 = vector.load %arg2[%c0, %c0_0] : memref<256x1024xf32, #tpu.memory_space<vmem>>, vector<256x1024xf32>
    %c0_1 = arith.constant 0 : index
    %c0_2 = arith.constant 0 : index
    %1 = vector.load %arg4[%c0_1, %c0_2] : memref<1024x256xf32, #tpu.memory_space<vmem>>, vector<1024x256xf32>
    %c0_3 = arith.constant 0 : index
    %c0_4 = arith.constant 0 : index
    %2 = vector.load %arg3[%c0_3, %c0_4] : memref<1x1024xf32, #tpu.memory_space<vmem>>, vector<1x1024xf32>
    %c0_5 = arith.constant 0 : index
    %c0_6 = arith.constant 0 : index
    %3 = vector.load %arg5[%c0_5, %c0_6] : memref<1x256xf32, #tpu.memory_space<vmem>>, vector<1x256xf32>
    %c0_7 = arith.constant 0 : index
    %c0_8 = arith.constant 0 : index
    %4 = vector.load %arg1[%c0_7, %c0_8] : memref<8x256xf32, #tpu.memory_space<vmem>>, vector<8x256xf32>
    %cst = arith.constant dense<0.000000e+00> : vector<8x1024xf32>
    %5 = tpu.matmul %4, %0, %cst {dimension_numbers = #tpu.dot_dimension_numbers<[1], [0], [0], [1], [0, 0, 1, 1], [], []>} : vector<8x256xf32>, vector<256x1024xf32>, vector<8x1024xf32> -> vector<8x1024xf32>
    %6 = vector.broadcast %2 : vector<1x1024xf32> to vector<8x1024xf32>
    %7 = arith.addf %5, %6 : vector<8x1024xf32>
    %8 = arith.mulf %7, %7 : vector<8x1024xf32>
    %cst_9 = arith.constant 4.471500e-02 : f32
    %9 = vector.broadcast %cst_9 : f32 to vector<8x1024xf32>
    %10 = arith.mulf %9, %8 : vector<8x1024xf32>
    %cst_10 = arith.constant 1.000000e+00 : f32
    %11 = vector.broadcast %cst_10 : f32 to vector<8x1024xf32>
    %12 = arith.addf %11, %10 : vector<8x1024xf32>
    %13 = arith.mulf %7, %12 : vector<8x1024xf32>
    %cst_11 = arith.constant 0.797884583 : f32
    %14 = vector.broadcast %cst_11 : f32 to vector<8x1024xf32>
    %15 = arith.mulf %14, %13 : vector<8x1024xf32>
    %16 = math.tanh %15 : vector<8x1024xf32>
    %cst_12 = arith.constant 5.000000e-01 : f32
    %17 = vector.broadcast %cst_12 : f32 to vector<8x1024xf32>
    %18 = arith.mulf %17, %7 : vector<8x1024xf32>
    %19 = arith.mulf %18, %16 : vector<8x1024xf32>
    %20 = arith.addf %18, %19 : vector<8x1024xf32>
    %cst_13 = arith.constant dense<0.000000e+00> : vector<8x256xf32>
    %21 = tpu.matmul %20, %1, %cst_13 {dimension_numbers = #tpu.dot_dimension_numbers<[1], [0], [0], [1], [0, 0, 1, 1], [], []>} : vector<8x1024xf32>, vector<1024x256xf32>, vector<8x256xf32> -> vector<8x256xf32>
    %22 = vector.broadcast %3 : vector<1x256xf32> to vector<8x256xf32>
    %23 = arith.addf %21, %22 : vector<8x256xf32>
    %c0_14 = arith.constant 0 : index
    %c0_15 = arith.constant 0 : index
    %24 = vector.load %arg6[%c0_14, %c0_15] : memref<8x256xf32, #tpu.memory_space<vmem>>, vector<8x256xf32>
    tpu.vector_store %arg6[%c0_14, %c0_15], %23 {strides = array<i32>} : memref<8x256xf32, #tpu.memory_space<vmem>>, vector<8x256xf32>,
    return
  }
  func.func @transform_0(%arg0: i32) -> (i32, i32) {
    %c0_i32 = arith.constant 0 : i32
    %c0_i32_0 = arith.constant 0 : i32
    return %arg0, %c0_i32 : i32, i32
  }
  func.func @transform_1(%arg0: i32) -> (i32, i32) {
    %c0_i32 = arith.constant 0 : i32
    %c0_i32_0 = arith.constant 0 : i32
    %c0_i32_1 = arith.constant 0 : i32
    return %c0_i32, %c0_i32_0 : i32, i32
  }
  func.func @transform_2(%arg0: i32) -> (i32, i32) {
    %c0_i32 = arith.constant 0 : i32
    %c0_i32_0 = arith.constant 0 : i32
    %c0_i32_1 = arith.constant 0 : i32
    return %c0_i32, %c0_i32_0 : i32, i32
  }
  func.func @transform_3(%arg0: i32) -> (i32, i32) {
    %c0_i32 = arith.constant 0 : i32
    %c0_i32_0 = arith.constant 0 : i32
    %c0_i32_1 = arith.constant 0 : i32
    return %c0_i32, %c0_i32_0 : i32, i32
  }
  func.func @transform_4(%arg0: i32) -> (i32, i32) {
    %c0_i32 = arith.constant 0 : i32
    %c0_i32_0 = arith.constant 0 : i32
    %c0_i32_1 = arith.constant 0 : i32
    return %c0_i32, %c0_i32_0 : i32, i32
  }
  func.func @transform_5(%arg0: i32) -> (i32, i32) {
    %c0_i32 = arith.constant 0 : i32
    %c0_i32_0 = arith.constant 0 : i32
    return %arg0, %c0_i32 : i32, i32
  }
}

</mosaic_0001>

<llo_original>
// kernel: tpu_custom_call.1
$region0: #{tpu_custom_call.1}
  #allocation0 [shape = 'u32[]', space=smem, size = 0x4, offset = 0x4, fixed_abs, tag = 'smem constant byte address 0x4 - core index']
  #allocation1 [shape = 'u32[72,128]{1,0:T(1,128)}', space=vmem, size = 0x9000, scoped, tag = 'internal scratch']
  %s0 = inlined_call_operand.hbm [shape: f32[8,256], index: 0, kind: input, shape index: {}]
  %s1 = inlined_call_operand.hbm [shape: f32[256,1024], index: 1, kind: input, shape index: {}]
  %s2 = inlined_call_operand.hbm [shape: f32[1,1024], index: 2, kind: input, shape index: {}]
  %s3 = inlined_call_operand.hbm [shape: f32[1024,256], index: 3, kind: input, shape index: {}]
  %s4 = inlined_call_operand.vmem [shape: f32[1,256], index: 4, kind: input, shape index: {}]
  %s5 = inlined_call_operand.hbm [shape: f32[8,256], index: 5, kind: output, shape index: {}]
  %s6 = sld [smem:[#allocation0]]
  $region46: #{tpu_custom_call.1} parent=0
    _
  %s8 = ssub.s32 1, %s6
  %s9 = scalar_select 0, %s8, %s6
  $region1: #{tpu_custom_call.1} parent=0
    #allocation2 [shape = 'u8[8192]{0}', space=vmem, size = 0x2000, scoped, tag = 'input window, operand 0, single buffered']
    #allocation3 [shape = 's32[1]{0}', space=sflag, size = 0x4, scoped, tag = 'scoped memory for tpu_custom_call.1']
    #allocation4 [shape = 's32[1]{0}', space=sflag, size = 0x4, scoped, tag = 'scoped memory for tpu_custom_call.1']
    #allocation5 [shape = 'u8[1048576]{0}', space=vmem, size = 0x100000, scoped, tag = 'input window, operand 1, single buffered']
    #allocation6 [shape = 's32[1]{0}', space=sflag, size = 0x4, scoped, tag = 'scoped memory for tpu_custom_call.1']
    #allocation7 [shape = 'u8[4096]{0}', space=vmem, size = 0x1000, scoped, tag = 'input window, operand 2, single buffered']
    #allocation8 [shape = 'u8[1048576]{0}', space=vmem, size = 0x100000, scoped, tag = 'input window, operand 3, single buffered']
    #allocation9 [shape = 's32[1]{0}', space=sflag, size = 0x4, scoped, tag = 'scoped memory for tpu_custom_call.1']
    #allocation10 [shape = 'u8[8192]{0}', space=vmem, size = 0x2000, scoped, tag = 'output window, operand 0, single buffered']
    %10 = vsyncpa [#allocation3], 0
    %11 = vsyncpa [#allocation6], 0
    %12 = vsyncpa [#allocation9], 0
    %13 = vsyncpa [#allocation4], 0
    // Predicated region
    $region2: #{tpu_custom_call.1} parent=1 // pred_check
      _
    $region3: #{tpu_custom_call.1} parent=1 // pred_check_branch
      %15 = sbr.rel (0) target = $region5
    $region4: #{tpu_custom_call.1} parent=1 // pred_region
      %17 = vsyncadd [#allocation3], 0
      %s19 = sshll.u32 %s0, 4
      %s20 = int_to_ptr.hbm [resolvable:$true] %s19
      %s21 = sshll.u32 [#allocation2], 4
      %s22 = int_to_ptr.vmem [resolvable:$true] %s21
      %24 = dma.hbm_to_vmem [thread:$0]  %s20, 256, %s22, [#allocation3]
    $region5: #{tpu_custom_call.1} parent=1 // pred_fallthru
      _
    // Predicated region
    $region6: #{tpu_custom_call.1} parent=1 // pred_check
      _
    $region7: #{tpu_custom_call.1} parent=1 // pred_check_branch
      %26 = sbr.rel (0) target = $region9
    $region8: #{tpu_custom_call.1} parent=1 // pred_region
      %28 = vsyncadd [#allocation6], 0
      %s29 = sshll.u32 %s1, 4
      %s30 = int_to_ptr.hbm [resolvable:$true] %s29
      %s31 = sshll.u32 [#allocation5], 4
      %s32 = int_to_ptr.vmem [resolvable:$true] %s31
      %37 = dma.hbm_to_vmem [thread:$0]  %s30, 32768, %s32, [#allocation6], 1024, 1024, 64
    $region9: #{tpu_custom_call.1} parent=1 // pred_fallthru
      _
    // Predicated region
    $region10: #{tpu_custom_call.1} parent=1 // pred_check
      _
    $region11: #{tpu_custom_call.1} parent=1 // pred_check_branch
      %39 = sbr.rel (0) target = $region13
    $region12: #{tpu_custom_call.1} parent=1 // pred_region
      %41 = vsyncadd [#allocation6], 0
      %s43 = sshll.u32 %s2, 4
      %s44 = int_to_ptr.hbm [resolvable:$true] %s43
      %s45 = sshll.u32 [#allocation7], 4
      %s46 = int_to_ptr.vmem [resolvable:$true] %s45
      %48 = dma.hbm_to_vmem [thread:$0]  %s44, 128, %s46, [#allocation6]
    $region13: #{tpu_custom_call.1} parent=1 // pred_fallthru
      _
    // Predicated region
    $region14: #{tpu_custom_call.1} parent=1 // pred_check
      _
    $region15: #{tpu_custom_call.1} parent=1 // pred_check_branch
      %50 = sbr.rel (0) target = $region17
    $region16: #{tpu_custom_call.1} parent=1 // pred_region
      %52 = vsyncadd [#allocation9], 0
      %s53 = sshll.u32 %s3, 4
      %s54 = int_to_ptr.hbm [resolvable:$true] %s53
      %s55 = sshll.u32 [#allocation8], 4
      %s56 = int_to_ptr.vmem [resolvable:$true] %s55
      %61 = dma.hbm_to_vmem [thread:$0]  %s54, 32768, %s56, [#allocation9], 256, 256, 16
    $region17: #{tpu_custom_call.1} parent=1 // pred_fallthru
      _
    // Predicated region
    $region18: #{tpu_custom_call.1} parent=1 // pred_check
      _
    $region19: #{tpu_custom_call.1} parent=1 // pred_check_branch
      %63 = sbr.rel (0) target = $region21
    $region20: #{tpu_custom_call.1} parent=1 // pred_region
      _
    $region21: #{tpu_custom_call.1} parent=1 // pred_fallthru
      _
    // Predicated region
    $region22: #{tpu_custom_call.1} parent=1 // pred_check
      _
    $region23: #{tpu_custom_call.1} parent=1 // pred_check_branch
      %65 = sbr.rel (0) target = $region25
    $region24: #{tpu_custom_call.1} parent=1 // pred_region
      %67 = dma.done [#allocation3], 256
    $region25: #{tpu_custom_call.1} parent=1 // pred_fallthru
      _
    // Predicated region
    $region26: #{tpu_custom_call.1} parent=1 // pred_check
      _
    $region27: #{tpu_custom_call.1} parent=1 // pred_check_branch
      %69 = sbr.rel (0) target = $region29
    $region28: #{tpu_custom_call.1} parent=1 // pred_region
      %71 = dma.done [#allocation6], 32768
    $region29: #{tpu_custom_call.1} parent=1 // pred_fallthru
      _
    // Predicated region
    $region30: #{tpu_custom_call.1} parent=1 // pred_check
      _
    $region31: #{tpu_custom_call.1} parent=1 // pred_check_branch
      %73 = sbr.rel (0) target = $region33
    $region32: #{tpu_custom_call.1} parent=1 // pred_region
      %75 = dma.done [#allocation6], 128
    $region33: #{tpu_custom_call.1} parent=1 // pred_fallthru
      _
    // Predicated region
    $region34: #{tpu_custom_call.1} parent=1 // pred_check
      _
    $region35: #{tpu_custom_call.1} parent=1 // pred_check_branch
      %77 = sbr.rel (0) target = $region37
    $region36: #{tpu_custom_call.1} parent=1 // pred_region
      %79 = dma.done [#allocation9], 32768
    $region37: #{tpu_custom_call.1} parent=1 // pred_fallthru
      _
    %v80 = vld [vmem:[#allocation5] sm:$0xff]
    %v81 = vld [vmem:[#allocation5 + $0x8] sm:$0xff]
    %v82 = vld [vmem:[#allocation5 + $0x10] sm:$0xff]
    %v83 = vld [vmem:[#allocation5 + $0x18] sm:$0xff]
    %v84 = vld [vmem:[#allocation5 + $0x20] sm:$0xff]
    %v85 = vld [vmem:[#allocation5 + $0x28] sm:$0xff]
    %v86 = vld [vmem:[#allocation5 + $0x30] sm:$0xff]
    %v87 = vld [vmem:[#allocation5 + $0x38] sm:$0xff]
    %v88 = vld [vmem:[#allocation5 + $0x40] sm:$0xff]
    %v89 = vld [vmem:[#allocation5 + $0x48] sm:$0xff]
    %v90 = vld [vmem:[#allocation5 + $0x50] sm:$0xff]
    %v91 = vld [vmem:[#allocation5 + $0x58] sm:$0xff]
    %v92 = vld [vmem:[#allocation5 + $0x60] sm:$0xff]
    %v93 = vld [vmem:[#allocation5 + $0x68] sm:$0xff]
    %v94 = vld [vmem:[#allocation5 + $0x70] sm:$0xff]
    %v95 = vld [vmem:[#allocation5 + $0x78] sm:$0xff]
    %v96 = vld [vmem:[#allocation5 + $0x80] sm:$0xff]
    %v97 = vld [vmem:[#allocation5 + $0x88] sm:$0xff]
    %v98 = vld [vmem:[#allocation5 + $0x90] sm:$0xff]
    %v99 = vld [vmem:[#allocation5 + $0x98] sm:$0xff]
    %v100 = vld [vmem:[#allocation5 + $0xa0] sm:$0xff]
    %v101 = vld [vmem:[#allocation5 + $0xa8] sm:$0xff]
    %v102 = vld [vmem:[#allocation5 + $0xb0] sm:$0xff]
    %v103 = vld [vmem:[#allocation5 + $0xb8] sm:$0xff]
    %v104 = vld [vmem:[#allocation5 + $0xc0] sm:$0xff]
    %v105 = vld [vmem:[#allocation5 + $0xc8] sm:$0xff]
    %v106 = vld [vmem:[#allocation5 + $0xd0] sm:$0xff]
    %v107 = vld [vmem:[#allocation5 + $0xd8] sm:$0xff]
    %v108 = vld [vmem:[#allocation5 + $0xe0] sm:$0xff]
    %v109 = vld [vmem:[#allocation5 + $0xe8] sm:$0xff]
    %v110 = vld [vmem:[#allocation5 + $0xf0] sm:$0xff]
    %v111 = vld [vmem:[#allocation5 + $0xf8] sm:$0xff]
    %v112 = vld [vmem:[#allocation5 + $0x100] sm:$0xff]
    %v113 = vld [vmem:[#allocation5 + $0x108] sm:$0xff]
    %v114 = vld [vmem:[#allocation5 + $0x110] sm:$0xff]
    %v115 = vld [vmem:[#allocation5 + $0x118] sm:$0xff]
    %v116 = vld [vmem:[#allocation5 + $0x120] sm:$0xff]
    %v117 = vld [vmem:[#allocation5 + $0x128] sm:$0xff]
    %v118 = vld [vmem:[#allocation5 + $0x130] sm:$0xff]
    %v119 = vld [vmem:[#allocation5 + $0x138] sm:$0xff]
    %v120 = vld [vmem:[#allocation5 + $0x140] sm:$0xff]
    %v121 = vld [vmem:[#allocation5 + $0x148] sm:$0xff]
    %v122 = vld [vmem:[#allocation5 + $0x150] sm:$0xff]
    %v123 = vld [vmem:[#allocation5 + $0x158] sm:$0xff]
    %v124 = vld [vmem:[#allocation5 + $0x160] sm:$0xff]
    %v125 = vld [vmem:[#allocation5 + $0x168] sm:$0xff]
    %v126 = vld [vmem:[#allocation5 + $0x170] sm:$0xff]
    %v127 = vld [vmem:[#allocation5 + $0x178] sm:$0xff]
    %v128 = vld [vmem:[#allocation5 + $0x180] sm:$0xff]
    %v129 = vld [vmem:[#allocation5 + $0x188] sm:$0xff]
    %v130 = vld [vmem:[#allocation5 + $0x190] sm:$0xff]
    %v131 = vld [vmem:[#allocation5 + $0x198] sm:$0xff]
    %v132 = vld [vmem:[#allocation5 + $0x1a0] sm:$0xff]
    %v133 = vld [vmem:[#allocation5 + $0x1a8] sm:$0xff]
    %v134 = vld [vmem:[#allocation5 + $0x1b0] sm:$0xff]
    %v135 = vld [vmem:[#allocation5 + $0x1b8] sm:$0xff]
    %v136 = vld [vmem:[#allocation5 + $0x1c0] sm:$0xff]
    %v137 = vld [vmem:[#allocation5 + $0x1c8] sm:$0xff]
    %v138 = vld [vmem:[#allocation5 + $0x1d0] sm:$0xff]
    %v139 = vld [vmem:[#allocation5 + $0x1d8] sm:$0xff]
    %v140 = vld [vmem:[#allocation5 + $0x1e0] sm:$0xff]
    %v141 = vld [vmem:[#allocation5 + $0x1e8] sm:$0xff]
    %v142 = vld [vmem:[#allocation5 + $0x1f0] sm:$0xff]
    %v143 = vld [vmem:[#allocation5 + $0x1f8] sm:$0xff]
    %v144 = vld [vmem:[#allocation5 + $0x200] sm:$0xff]
    %v145 = vld [vmem:[#allocation5 + $0x208] sm:$0xff]
    %v146 = vld [vmem:[#allocation5 + $0x210] sm:$0xff]
    %v147 = vld [vmem:[#allocation5 + $0x218] sm:$0xff]
    %v148 = vld [vmem:[#allocation5 + $0x220] sm:$0xff]
    %v149 = vld [vmem:[#allocation5 + $0x228] sm:$0xff]
    %v150 = vld [vmem:[#allocation5 + $0x230] sm:$0xff]
    %v151 = vld [vmem:[#allocation5 + $0x238] sm:$0xff]
    %v152 = vld [vmem:[#allocation5 + $0x240] sm:$0xff]
    %v153 = vld [vmem:[#allocation5 + $0x248] sm:$0xff]
    %v154 = vld [vmem:[#allocation5 + $0x250] sm:$0xff]
    %v155 = vld [vmem:[#allocation5 + $0x258] sm:$0xff]
    %v156 = vld [vmem:[#allocation5 + $0x260] sm:$0xff]
    %v157 = vld [vmem:[#allocation5 + $0x268] sm:$0xff]
    %v158 = vld [vmem:[#allocation5 + $0x270] sm:$0xff]
    %v159 = vld [vmem:[#allocation5 + $0x278] sm:$0xff]
    %v160 = vld [vmem:[#allocation5 + $0x280] sm:$0xff]
    %v161 = vld [vmem:[#allocation5 + $0x288] sm:$0xff]
    %v162 = vld [vmem:[#allocation5 + $0x290] sm:$0xff]
    %v163 = vld [vmem:[#allocation5 + $0x298] sm:$0xff]
    %v164 = vld [vmem:[#allocation5 + $0x2a0] sm:$0xff]
    %v165 = vld [vmem:[#allocation5 + $0x2a8] sm:$0xff]
    %v166 = vld [vmem:[#allocation5 + $0x2b0] sm:$0xff]
    %v167 = vld [vmem:[#allocation5 + $0x2b8] sm:$0xff]
    %v168 = vld [vmem:[#allocation5 + $0x2c0] sm:$0xff]
    %v169 = vld [vmem:[#allocation5 + $0x2c8] sm:$0xff]
    %v170 = vld [vmem:[#allocation5 + $0x2d0] sm:$0xff]
    %v171 = vld [vmem:[#allocation5 + $0x2d8] sm:$0xff]
    %v172 = vld [vmem:[#allocation5 + $0x2e0] sm:$0xff]
    %v173 = vld [vmem:[#allocation5 + $0x2e8] sm:$0xff]
    %v174 = vld [vmem:[#allocation5 + $0x2f0] sm:$0xff]
    %v175 = vld [vmem:[#allocation5 + $0x2f8] sm:$0xff]
    %v176 = vld [vmem:[#allocation5 + $0x300] sm:$0xff]
    %v177 = vld [vmem:[#allocation5 + $0x308] sm:$0xff]
    %v178 = vld [vmem:[#allocation5 + $0x310] sm:$0xff]
    %v179 = vld [vmem:[#allocation5 + $0x318] sm:$0xff]
    %v180 = vld [vmem:[#allocation5 + $0x320] sm:$0xff]
    %v181 = vld [vmem:[#allocation5 + $0x328] sm:$0xff]
    %v182 = vld [vmem:[#allocation5 + $0x330] sm:$0xff]
    %v183 = vld [vmem:[#allocation5 + $0x338] sm:$0xff]
    %v184 = vld [vmem:[#allocation5 + $0x340] sm:$0xff]
    %v185 = vld [vmem:[#allocation5 + $0x348] sm:$0xff]
    %v186 = vld [vmem:[#allocation5 + $0x350] sm:$0xff]
    %v187 = vld [vmem:[#allocation5 + $0x358] sm:$0xff]
    %v188 = vld [vmem:[#allocation5 + $0x360] sm:$0xff]
    %v189 = vld [vmem:[#allocation5 + $0x368] sm:$0xff]
    %v190 = vld [vmem:[#allocation5 + $0x370] sm:$0xff]
    %v191 = vld [vmem:[#allocation5 + $0x378] sm:$0xff]
    %v192 = vld [vmem:[#allocation5 + $0x380] sm:$0xff]
    %v193 = vld [vmem:[#allocation5 + $0x388] sm:$0xff]
    %v194 = vld [vmem:[#allocation5 + $0x390] sm:$0xff]
    %v195 = vld [vmem:[#allocation5 + $0x398] sm:$0xff]
    %v196 = vld [vmem:[#allocation5 + $0x3a0] sm:$0xff]
    %v197 = vld [vmem:[#allocation5 + $0x3a8] sm:$0xff]
    %v198 = vld [vmem:[#allocation5 + $0x3b0] sm:$0xff]
    %v199 = vld [vmem:[#allocation5 + $0x3b8] sm:$0xff]
    %v200 = vld [vmem:[#allocation5 + $0x3c0] sm:$0xff]
    %v201 = vld [vmem:[#allocation5 + $0x3c8] sm:$0xff]
    %v202 = vld [vmem:[#allocation5 + $0x3d0] sm:$0xff]
    %v203 = vld [vmem:[#allocation5 + $0x3d8] sm:$0xff]
    %v204 = vld [vmem:[#allocation5 + $0x3e0] sm:$0xff]
    %v205 = vld [vmem:[#allocation5 + $0x3e8] sm:$0xff]
    %v206 = vld [vmem:[#allocation5 + $0x3f0] sm:$0xff]
    %v207 = vld [vmem:[#allocation5 + $0x3f8] sm:$0xff]
    %v208 = vld [vmem:[#allocation5 + $0x400] sm:$0xff]
    %v209 = vld [vmem:[#allocation5 + $0x408] sm:$0xff]
    %v210 = vld [vmem:[#allocation5 + $0x410] sm:$0xff]
    %v211 = vld [vmem:[#allocation5 + $0x418] sm:$0xff]
    %v212 = vld [vmem:[#allocation5 + $0x420] sm:$0xff]
    %v213 = vld [vmem:[#allocation5 + $0x428] sm:$0xff]
    %v214 = vld [vmem:[#allocation5 + $0x430] sm:$0xff]
    %v215 = vld [vmem:[#allocation5 + $0x438] sm:$0xff]
    %v216 = vld [vmem:[#allocation5 + $0x440] sm:$0xff]
    %v217 = vld [vmem:[#allocation5 + $0x448] sm:$0xff]
    %v218 = vld [vmem:[#allocation5 + $0x450] sm:$0xff]
    %v219 = vld [vmem:[#allocation5 + $0x458] sm:$0xff]
    %v220 = vld [vmem:[#allocation5 + $0x460] sm:$0xff]
    %v221 = vld [vmem:[#allocation5 + $0x468] sm:$0xff]
    %v222 = vld [vmem:[#allocation5 + $0x470] sm:$0xff]
    %v223 = vld [vmem:[#allocation5 + $0x478] sm:$0xff]
    %v224 = vld [vmem:[#allocation5 + $0x480] sm:$0xff]
    %v225 = vld [vmem:[#allocation5 + $0x488] sm:$0xff]
    %v226 = vld [vmem:[#allocation5 + $0x490] sm:$0xff]
    %v227 = vld [vmem:[#allocation5 + $0x498] sm:$0xff]
    %v228 = vld [vmem:[#allocation5 + $0x4a0] sm:$0xff]
    %v229 = vld [vmem:[#allocation5 + $0x4a8] sm:$0xff]
    %v230 = vld [vmem:[#allocation5 + $0x4b0] sm:$0xff]
    %v231 = vld [vmem:[#allocation5 + $0x4b8] sm:$0xff]
    %v232 = vld [vmem:[#allocation5 + $0x4c0] sm:$0xff]
    %v233 = vld [vmem:[#allocation5 + $0x4c8] sm:$0xff]
    %v234 = vld [vmem:[#allocation5 + $0x4d0] sm:$0xff]
    %v235 = vld [vmem:[#allocation5 + $0x4d8] sm:$0xff]
    %v236 = vld [vmem:[#allocation5 + $0x4e0] sm:$0xff]
    %v237 = vld [vmem:[#allocation5 + $0x4e8] sm:$0xff]
    %v238 = vld [vmem:[#allocation5 + $0x4f0] sm:$0xff]
    %v239 = vld [vmem:[#allocation5 + $0x4f8] sm:$0xff]
    %v240 = vld [vmem:[#allocation5 + $0x500] sm:$0xff]
    %v241 = vld [vmem:[#allocation5 + $0x508] sm:$0xff]
    %v242 = vld [vmem:[#allocation5 + $0x510] sm:$0xff]
    %v243 = vld [vmem:[#allocation5 + $0x518] sm:$0xff]
    %v244 = vld [vmem:[#allocation5 + $0x520] sm:$0xff]
    %v245 = vld [vmem:[#allocation5 + $0x528] sm:$0xff]
    %v246 = vld [vmem:[#allocation5 + $0x530] sm:$0xff]
    %v247 = vld [vmem:[#allocation5 + $0x538] sm:$0xff]
    %v248 = vld [vmem:[#allocation5 + $0x540] sm:$0xff]
    %v249 = vld [vmem:[#allocation5 + $0x548] sm:$0xff]
    %v250 = vld [vmem:[#allocation5 + $0x550] sm:$0xff]
    %v251 = vld [vmem:[#allocation5 + $0x558] sm:$0xff]
    %v252 = vld [vmem:[#allocation5 + $0x560] sm:$0xff]
    %v253 = vld [vmem:[#allocation5 + $0x568] sm:$0xff]
    %v254 = vld [vmem:[#allocation5 + $0x570] sm:$0xff]
    %v255 = vld [vmem:[#allocation5 + $0x578] sm:$0xff]
    %v256 = vld [vmem:[#allocation5 + $0x580] sm:$0xff]
    %v257 = vld [vmem:[#allocation5 + $0x588] sm:$0xff]
    %v258 = vld [vmem:[#allocation5 + $0x590] sm:$0xff]
    %v259 = vld [vmem:[#allocation5 + $0x598] sm:$0xff]
    %v260 = vld [vmem:[#allocation5 + $0x5a0] sm:$0xff]
    %v261 = vld [vmem:[#allocation5 + $0x5a8] sm:$0xff]
    %v262 = vld [vmem:[#allocation5 + $0x5b0] sm:$0xff]
    %v263 = vld [vmem:[#allocation5 + $0x5b8] sm:$0xff]
    %v264 = vld [vmem:[#allocation5 + $0x5c0] sm:$0xff]
    %v265 = vld [vmem:[#allocation5 + $0x5c8] sm:$0xff]
    %v266 = vld [vmem:[#allocation5 + $0x5d0] sm:$0xff]
    %v267 = vld [vmem:[#allocation5 + $0x5d8] sm:$0xff]
    %v268 = vld [vmem:[#allocation5 + $0x5e0] sm:$0xff]
    %v269 = vld [vmem:[#allocation5 + $0x5e8] sm:$0xff]
    %v270 = vld [vmem:[#allocation5 + $0x5f0] sm:$0xff]
    %v271 = vld [vmem:[#allocation5 + $0x5f8] sm:$0xff]
    %v272 = vld [vmem:[#allocation5 + $0x600] sm:$0xff]
    %v273 = vld [vmem:[#allocation5 + $0x608] sm:$0xff]
    %v274 = vld [vmem:[#allocation5 + $0x610] sm:$0xff]
    %v275 = vld [vmem:[#allocation5 + $0x618] sm:$0xff]
    %v276 = vld [vmem:[#allocation5 + $0x620] sm:$0xff]
    %v277 = vld [vmem:[#allocation5 + $0x628] sm:$0xff]
    %v278 = vld [vmem:[#allocation5 + $0x630] sm:$0xff]
    %v279 = vld [vmem:[#allocation5 + $0x638] sm:$0xff]
    %v280 = vld [vmem:[#allocation5 + $0x640] sm:$0xff]
    %v281 = vld [vmem:[#allocation5 + $0x648] sm:$0xff]
    %v282 = vld [vmem:[#allocation5 + $0x650] sm:$0xff]
    %v283 = vld [vmem:[#allocation5 + $0x658] sm:$0xff]
    %v284 = vld [vmem:[#allocation5 + $0x660] sm:$0xff]
    %v285 = vld [vmem:[#allocation5 + $0x668] sm:$0xff]
    %v286 = vld [vmem:[#allocation5 + $0x670] sm:$0xff]
    %v287 = vld [vmem:[#allocation5 + $0x678] sm:$0xff]
    %v288 = vld [vmem:[#allocation5 + $0x680] sm:$0xff]
    %v289 = vld [vmem:[#allocation5 + $0x688] sm:$0xff]
    %v290 = vld [vmem:[#allocation5 + $0x690] sm:$0xff]
    %v291 = vld [vmem:[#allocation5 + $0x698] sm:$0xff]
    %v292 = vld [vmem:[#allocation5 + $0x6a0] sm:$0xff]
    %v293 = vld [vmem:[#allocation5 + $0x6a8] sm:$0xff]
    %v294 = vld [vmem:[#allocation5 + $0x6b0] sm:$0xff]
    %v295 = vld [vmem:[#allocation5 + $0x6b8] sm:$0xff]
    %v296 = vld [vmem:[#allocation5 + $0x6c0] sm:$0xff]
    %v297 = vld [vmem:[#allocation5 + $0x6c8] sm:$0xff]
    %v298 = vld [vmem:[#allocation5 + $0x6d0] sm:$0xff]
    %v299 = vld [vmem:[#allocation5 + $0x6d8] sm:$0xff]
    %v300 = vld [vmem:[#allocation5 + $0x6e0] sm:$0xff]
    %v301 = vld [vmem:[#allocation5 + $0x6e8] sm:$0xff]
    %v302 = vld [vmem:[#allocation5 + $0x6f0] sm:$0xff]
    %v303 = vld [vmem:[#allocation5 + $0x6f8] sm:$0xff]
    %v304 = vld [vmem:[#allocation5 + $0x700] sm:$0xff]
    %v305 = vld [vmem:[#allocation5 + $0x708] sm:$0xff]
    %v306 = vld [vmem:[#allocation5 + $0x710] sm:$0xff]
    %v307 = vld [vmem:[#allocation5 + $0x718] sm:$0xff]
    %v308 = vld [vmem:[#allocation5 + $0x720] sm:$0xff]
    %v309 = vld [vmem:[#allocation5 + $0x728] sm:$0xff]
    %v310 = vld [vmem:[#allocation5 + $0x730] sm:$0xff]
    %v311 = vld [vmem:[#allocation5 + $0x738] sm:$0xff]
    %v312 = vld [vmem:[#allocation5 + $0x740] sm:$0xff]
    %v313 = vld [vmem:[#allocation5 + $0x748] sm:$0xff]
    %v314 = vld [vmem:[#allocation5 + $0x750] sm:$0xff]
    %v315 = vld [vmem:[#allocation5 + $0x758] sm:$0xff]
    %v316 = vld [vmem:[#allocation5 + $0x760] sm:$0xff]
    %v317 = vld [vmem:[#allocation5 + $0x768] sm:$0xff]
    %v318 = vld [vmem:[#allocation5 + $0x770] sm:$0xff]
    %v319 = vld [vmem:[#allocation5 + $0x778] sm:$0xff]
    %v320 = vld [vmem:[#allocation5 + $0x780] sm:$0xff]
    %v321 = vld [vmem:[#allocation5 + $0x788] sm:$0xff]
    %v322 = vld [vmem:[#allocation5 + $0x790] sm:$0xff]
    %v323 = vld [vmem:[#allocation5 + $0x798] sm:$0xff]
    %v324 = vld [vmem:[#allocation5 + $0x7a0] sm:$0xff]
    %v325 = vld [vmem:[#allocation5 + $0x7a8] sm:$0xff]
    %v326 = vld [vmem:[#allocation5 + $0x7b0] sm:$0xff]
    %v327 = vld [vmem:[#allocation5 + $0x7b8] sm:$0xff]
    %v328 = vld [vmem:[#allocation5 + $0x7c0] sm:$0xff]
    %v329 = vld [vmem:[#allocation5 + $0x7c8] sm:$0xff]
    %v330 = vld [vmem:[#allocation5 + $0x7d0] sm:$0xff]
    %v331 = vld [vmem:[#allocation5 + $0x7d8] sm:$0xff]
    %v332 = vld [vmem:[#allocation5 + $0x7e0] sm:$0xff]
    %v333 = vld [vmem:[#allocation5 + $0x7e8] sm:$0xff]
    %v334 = vld [vmem:[#allocation5 + $0x7f0] sm:$0xff]
    %v335 = vld [vmem:[#allocation5 + $0x7f8] sm:$0xff]
    %v336 = vld [vmem:[#allocation8] sm:$0xff]
    %v337 = vld [vmem:[#allocation8 + $0x8] sm:$0xff]
    %v338 = vld [vmem:[#allocation8 + $0x10] sm:$0xff]
    %v339 = vld [vmem:[#allocation8 + $0x18] sm:$0xff]
    %v340 = vld [vmem:[#allocation8 + $0x20] sm:$0xff]
    %v341 = vld [vmem:[#allocation8 + $0x28] sm:$0xff]
    %v342 = vld [vmem:[#allocation8 + $0x30] sm:$0xff]
    %v343 = vld [vmem:[#allocation8 + $0x38] sm:$0xff]
    %v344 = vld [vmem:[#allocation8 + $0x40] sm:$0xff]
    %v345 = vld [vmem:[#allocation8 + $0x48] sm:$0xff]
    %v346 = vld [vmem:[#allocation8 + $0x50] sm:$0xff]
    %v347 = vld [vmem:[#allocation8 + $0x58] sm:$0xff]
    %v348 = vld [vmem:[#allocation8 + $0x60] sm:$0xff]
    %v349 = vld [vmem:[#allocation8 + $0x68] sm:$0xff]
    %v350 = vld [vmem:[#allocation8 + $0x70] sm:$0xff]
    %v351 = vld [vmem:[#allocation8 + $0x78] sm:$0xff]
    %v352 = vld [vmem:[#allocation8 + $0x80] sm:$0xff]
    %v353 = vld [vmem:[#allocation8 + $0x88] sm:$0xff]
    %v354 = vld [vmem:[#allocation8 + $0x90] sm:$0xff]
    %v355 = vld [vmem:[#allocation8 + $0x98] sm:$0xff]
    %v356 = vld [vmem:[#allocation8 + $0xa0] sm:$0xff]
    %v357 = vld [vmem:[#allocation8 + $0xa8] sm:$0xff]
    %v358 = vld [vmem:[#allocation8 + $0xb0] sm:$0xff]
    %v359 = vld [vmem:[#allocation8 + $0xb8] sm:$0xff]
    %v360 = vld [vmem:[#allocation8 + $0xc0] sm:$0xff]
    %v361 = vld [vmem:[#allocation8 + $0xc8] sm:$0xff]
    %v362 = vld [vmem:[#allocation8 + $0xd0] sm:$0xff]
    %v363 = vld [vmem:[#allocation8 + $0xd8] sm:$0xff]
    %v364 = vld [vmem:[#allocation8 + $0xe0] sm:$0xff]
    %v365 = vld [vmem:[#allocation8 + $0xe8] sm:$0xff]
    %v366 = vld [vmem:[#allocation8 + $0xf0] sm:$0xff]
    %v367 = vld [vmem:[#allocation8 + $0xf8] sm:$0xff]
    %v368 = vld [vmem:[#allocation8 + $0x100] sm:$0xff]
    %v369 = vld [vmem:[#allocation8 + $0x108] sm:$0xff]
    %v370 = vld [vmem:[#allocation8 + $0x110] sm:$0xff]
    %v371 = vld [vmem:[#allocation8 + $0x118] sm:$0xff]
    %v372 = vld [vmem:[#allocation8 + $0x120] sm:$0xff]
    %v373 = vld [vmem:[#allocation8 + $0x128] sm:$0xff]
    %v374 = vld [vmem:[#allocation8 + $0x130] sm:$0xff]
    %v375 = vld [vmem:[#allocation8 + $0x138] sm:$0xff]
    %v376 = vld [vmem:[#allocation8 + $0x140] sm:$0xff]
    %v377 = vld [vmem:[#allocation8 + $0x148] sm:$0xff]
    %v378 = vld [vmem:[#allocation8 + $0x150] sm:$0xff]
    %v379 = vld [vmem:[#allocation8 + $0x158] sm:$0xff]
    %v380 = vld [vmem:[#allocation8 + $0x160] sm:$0xff]
    %v381 = vld [vmem:[#allocation8 + $0x168] sm:$0xff]
    %v382 = vld [vmem:[#allocation8 + $0x170] sm:$0xff]
    %v383 = vld [vmem:[#allocation8 + $0x178] sm:$0xff]
    %v384 = vld [vmem:[#allocation8 + $0x180] sm:$0xff]
    %v385 = vld [vmem:[#allocation8 + $0x188] sm:$0xff]
    %v386 = vld [vmem:[#allocation8 + $0x190] sm:$0xff]
    %v387 = vld [vmem:[#allocation8 + $0x198] sm:$0xff]
    %v388 = vld [vmem:[#allocation8 + $0x1a0] sm:$0xff]
    %v389 = vld [vmem:[#allocation8 + $0x1a8] sm:$0xff]
    %v390 = vld [vmem:[#allocation8 + $0x1b0] sm:$0xff]
    %v391 = vld [vmem:[#allocation8 + $0x1b8] sm:$0xff]
    %v392 = vld [vmem:[#allocation8 + $0x1c0] sm:$0xff]
    %v393 = vld [vmem:[#allocation8 + $0x1c8] sm:$0xff]
    %v394 = vld [vmem:[#allocation8 + $0x1d0] sm:$0xff]
    %v395 = vld [vmem:[#allocation8 + $0x1d8] sm:$0xff]
    %v396 = vld [vmem:[#allocation8 + $0x1e0] sm:$0xff]
    %v397 = vld [vmem:[#allocation8 + $0x1e8] sm:$0xff]
    %v398 = vld [vmem:[#allocation8 + $0x1f0] sm:$0xff]
    %v399 = vld [vmem:[#allocation8 + $0x1f8] sm:$0xff]
    %v400 = vld [vmem:[#allocation8 + $0x200] sm:$0xff]
    %v401 = vld [vmem:[#allocation8 + $0x208] sm:$0xff]
    %v402 = vld [vmem:[#allocation8 + $0x210] sm:$0xff]
    %v403 = vld [vmem:[#allocation8 + $0x218] sm:$0xff]
    %v404 = vld [vmem:[#allocation8 + $0x220] sm:$0xff]
    %v405 = vld [vmem:[#allocation8 + $0x228] sm:$0xff]
    %v406 = vld [vmem:[#allocation8 + $0x230] sm:$0xff]
    %v407 = vld [vmem:[#allocation8 + $0x238] sm:$0xff]
    %v408 = vld [vmem:[#allocation8 + $0x240] sm:$0xff]
    %v409 = vld [vmem:[#allocation8 + $0x248] sm:$0xff]
    %v410 = vld [vmem:[#allocation8 + $0x250] sm:$0xff]
    %v411 = vld [vmem:[#allocation8 + $0x258] sm:$0xff]
    %v412 = vld [vmem:[#allocation8 + $0x260] sm:$0xff]
    %v413 = vld [vmem:[#allocation8 + $0x268] sm:$0xff]
    %v414 = vld [vmem:[#allocation8 + $0x270] sm:$0xff]
    %v415 = vld [vmem:[#allocation8 + $0x278] sm:$0xff]
    %v416 = vld [vmem:[#allocation8 + $0x280] sm:$0xff]
    %v417 = vld [vmem:[#allocation8 + $0x288] sm:$0xff]
    %v418 = vld [vmem:[#allocation8 + $0x290] sm:$0xff]
    %v419 = vld [vmem:[#allocation8 + $0x298] sm:$0xff]
    %v420 = vld [vmem:[#allocation8 + $0x2a0] sm:$0xff]
    %v421 = vld [vmem:[#allocation8 + $0x2a8] sm:$0xff]
    %v422 = vld [vmem:[#allocation8 + $0x2b0] sm:$0xff]
    %v423 = vld [vmem:[#allocation8 + $0x2b8] sm:$0xff]
    %v424 = vld [vmem:[#allocation8 + $0x2c0] sm:$0xff]
    %v425 = vld [vmem:[#allocation8 + $0x2c8] sm:$0xff]
    %v426 = vld [vmem:[#allocation8 + $0x2d0] sm:$0xff]
    %v427 = vld [vmem:[#allocation8 + $0x2d8] sm:$0xff]
    %v428 = vld [vmem:[#allocation8 + $0x2e0] sm:$0xff]
    %v429 = vld [vmem:[#allocation8 + $0x2e8] sm:$0xff]
    %v430 = vld [vmem:[#allocation8 + $0x2f0] sm:$0xff]
    %v431 = vld [vmem:[#allocation8 + $0x2f8] sm:$0xff]
    %v432 = vld [vmem:[#allocation8 + $0x300] sm:$0xff]
    %v433 = vld [vmem:[#allocation8 + $0x308] sm:$0xff]
    %v434 = vld [vmem:[#allocation8 + $0x310] sm:$0xff]
    %v435 = vld [vmem:[#allocation8 + $0x318] sm:$0xff]
    %v436 = vld [vmem:[#allocation8 + $0x320] sm:$0xff]
    %v437 = vld [vmem:[#allocation8 + $0x328] sm:$0xff]
    %v438 = vld [vmem:[#allocation8 + $0x330] sm:$0xff]
    %v439 = vld [vmem:[#allocation8 + $0x338] sm:$0xff]
    %v440 = vld [vmem:[#allocation8 + $0x340] sm:$0xff]
    %v441 = vld [vmem:[#allocation8 + $0x348] sm:$0xff]
    %v442 = vld [vmem:[#allocation8 + $0x350] sm:$0xff]
    %v443 = vld [vmem:[#allocation8 + $0x358] sm:$0xff]
    %v444 = vld [vmem:[#allocation8 + $0x360] sm:$0xff]
    %v445 = vld [vmem:[#allocation8 + $0x368] sm:$0xff]
    %v446 = vld [vmem:[#allocation8 + $0x370] sm:$0xff]
    %v447 = vld [vmem:[#allocation8 + $0x378] sm:$0xff]
    %v448 = vld [vmem:[#allocation8 + $0x380] sm:$0xff]
    %v449 = vld [vmem:[#allocation8 + $0x388] sm:$0xff]
    %v450 = vld [vmem:[#allocation8 + $0x390] sm:$0xff]
    %v451 = vld [vmem:[#allocation8 + $0x398] sm:$0xff]
    %v452 = vld [vmem:[#allocation8 + $0x3a0] sm:$0xff]
    %v453 = vld [vmem:[#allocation8 + $0x3a8] sm:$0xff]
    %v454 = vld [vmem:[#allocation8 + $0x3b0] sm:$0xff]
    %v455 = vld [vmem:[#allocation8 + $0x3b8] sm:$0xff]
    %v456 = vld [vmem:[#allocation8 + $0x3c0] sm:$0xff]
    %v457 = vld [vmem:[#allocation8 + $0x3c8] sm:$0xff]
    %v458 = vld [vmem:[#allocation8 + $0x3d0] sm:$0xff]
    %v459 = vld [vmem:[#allocation8 + $0x3d8] sm:$0xff]
    %v460 = vld [vmem:[#allocation8 + $0x3e0] sm:$0xff]
    %v461 = vld [vmem:[#allocation8 + $0x3e8] sm:$0xff]
    %v462 = vld [vmem:[#allocation8 + $0x3f0] sm:$0xff]
    %v463 = vld [vmem:[#allocation8 + $0x3f8] sm:$0xff]
    %v464 = vld [vmem:[#allocation8 + $0x400] sm:$0xff]
    %v465 = vld [vmem:[#allocation8 + $0x408] sm:$0xff]
    %v466 = vld [vmem:[#allocation8 + $0x410] sm:$0xff]
    %v467 = vld [vmem:[#allocation8 + $0x418] sm:$0xff]
    %v468 = vld [vmem:[#allocation8 + $0x420] sm:$0xff]
    %v469 = vld [vmem:[#allocation8 + $0x428] sm:$0xff]
    %v470 = vld [vmem:[#allocation8 + $0x430] sm:$0xff]
    %v471 = vld [vmem:[#allocation8 + $0x438] sm:$0xff]
    %v472 = vld [vmem:[#allocation8 + $0x440] sm:$0xff]
    %v473 = vld [vmem:[#allocation8 + $0x448] sm:$0xff]
    %v474 = vld [vmem:[#allocation8 + $0x450] sm:$0xff]
    %v475 = vld [vmem:[#allocation8 + $0x458] sm:$0xff]
    %v476 = vld [vmem:[#allocation8 + $0x460] sm:$0xff]
    %v477 = vld [vmem:[#allocation8 + $0x468] sm:$0xff]
    %v478 = vld [vmem:[#allocation8 + $0x470] sm:$0xff]
    %v479 = vld [vmem:[#allocation8 + $0x478] sm:$0xff]
    %v480 = vld [vmem:[#allocation8 + $0x480] sm:$0xff]
    %v481 = vld [vmem:[#allocation8 + $0x488] sm:$0xff]
    %v482 = vld [vmem:[#allocation8 + $0x490] sm:$0xff]
    %v483 = vld [vmem:[#allocation8 + $0x498] sm:$0xff]
    %v484 = vld [vmem:[#allocation8 + $0x4a0] sm:$0xff]
    %v485 = vld [vmem:[#allocation8 + $0x4a8] sm:$0xff]
    %v486 = vld [vmem:[#allocation8 + $0x4b0] sm:$0xff]
    %v487 = vld [vmem:[#allocation8 + $0x4b8] sm:$0xff]
    %v488 = vld [vmem:[#allocation8 + $0x4c0] sm:$0xff]
    %v489 = vld [vmem:[#allocation8 + $0x4c8] sm:$0xff]
    %v490 = vld [vmem:[#allocation8 + $0x4d0] sm:$0xff]
    %v491 = vld [vmem:[#allocation8 + $0x4d8] sm:$0xff]
    %v492 = vld [vmem:[#allocation8 + $0x4e0] sm:$0xff]
    %v493 = vld [vmem:[#allocation8 + $0x4e8] sm:$0xff]
    %v494 = vld [vmem:[#allocation8 + $0x4f0] sm:$0xff]
    %v495 = vld [vmem:[#allocation8 + $0x4f8] sm:$0xff]
    %v496 = vld [vmem:[#allocation8 + $0x500] sm:$0xff]
    %v497 = vld [vmem:[#allocation8 + $0x508] sm:$0xff]
    %v498 = vld [vmem:[#allocation8 + $0x510] sm:$0xff]
    %v499 = vld [vmem:[#allocation8 + $0x518] sm:$0xff]
    %v500 = vld [vmem:[#allocation8 + $0x520] sm:$0xff]
    %v501 = vld [vmem:[#allocation8 + $0x528] sm:$0xff]
    %v502 = vld [vmem:[#allocation8 + $0x530] sm:$0xff]
    %v503 = vld [vmem:[#allocation8 + $0x538] sm:$0xff]
    %v504 = vld [vmem:[#allocation8 + $0x540] sm:$0xff]
    %v505 = vld [vmem:[#allocation8 + $0x548] sm:$0xff]
    %v506 = vld [vmem:[#allocation8 + $0x550] sm:$0xff]
    %v507 = vld [vmem:[#allocation8 + $0x558] sm:$0xff]
    %v508 = vld [vmem:[#allocation8 + $0x560] sm:$0xff]
    %v509 = vld [vmem:[#allocation8 + $0x568] sm:$0xff]
    %v510 = vld [vmem:[#allocation8 + $0x570] sm:$0xff]
    %v511 = vld [vmem:[#allocation8 + $0x578] sm:$0xff]
    %v512 = vld [vmem:[#allocation8 + $0x580] sm:$0xff]
    %v513 = vld [vmem:[#allocation8 + $0x588] sm:$0xff]
    %v514 = vld [vmem:[#allocation8 + $0x590] sm:$0xff]
    %v515 = vld [vmem:[#allocation8 + $0x598] sm:$0xff]
    %v516 = vld [vmem:[#allocation8 + $0x5a0] sm:$0xff]
    %v517 = vld [vmem:[#allocation8 + $0x5a8] sm:$0xff]
    %v518 = vld [vmem:[#allocation8 + $0x5b0] sm:$0xff]
    %v519 = vld [vmem:[#allocation8 + $0x5b8] sm:$0xff]
    %v520 = vld [vmem:[#allocation8 + $0x5c0] sm:$0xff]
    %v521 = vld [vmem:[#allocation8 + $0x5c8] sm:$0xff]
    %v522 = vld [vmem:[#allocation8 + $0x5d0] sm:$0xff]
    %v523 = vld [vmem:[#allocation8 + $0x5d8] sm:$0xff]
    %v524 = vld [vmem:[#allocation8 + $0x5e0] sm:$0xff]
    %v525 = vld [vmem:[#allocation8 + $0x5e8] sm:$0xff]
    %v526 = vld [vmem:[#allocation8 + $0x5f0] sm:$0xff]
    %v527 = vld [vmem:[#allocation8 + $0x5f8] sm:$0xff]
    %v528 = vld [vmem:[#allocation8 + $0x600] sm:$0xff]
    %v529 = vld [vmem:[#allocation8 + $0x608] sm:$0xff]
    %v530 = vld [vmem:[#allocation8 + $0x610] sm:$0xff]
    %v531 = vld [vmem:[#allocation8 + $0x618] sm:$0xff]
    %v532 = vld [vmem:[#allocation8 + $0x620] sm:$0xff]
    %v533 = vld [vmem:[#allocation8 + $0x628] sm:$0xff]
    %v534 = vld [vmem:[#allocation8 + $0x630] sm:$0xff]
    %v535 = vld [vmem:[#allocation8 + $0x638] sm:$0xff]
    %v536 = vld [vmem:[#allocation8 + $0x640] sm:$0xff]
    %v537 = vld [vmem:[#allocation8 + $0x648] sm:$0xff]
    %v538 = vld [vmem:[#allocation8 + $0x650] sm:$0xff]
    %v539 = vld [vmem:[#allocation8 + $0x658] sm:$0xff]
    %v540 = vld [vmem:[#allocation8 + $0x660] sm:$0xff]
    %v541 = vld [vmem:[#allocation8 + $0x668] sm:$0xff]
    %v542 = vld [vmem:[#allocation8 + $0x670] sm:$0xff]
    %v543 = vld [vmem:[#allocation8 + $0x678] sm:$0xff]
    %v544 = vld [vmem:[#allocation8 + $0x680] sm:$0xff]
    %v545 = vld [vmem:[#allocation8 + $0x688] sm:$0xff]
    %v546 = vld [vmem:[#allocation8 + $0x690] sm:$0xff]
    %v547 = vld [vmem:[#allocation8 + $0x698] sm:$0xff]
    %v548 = vld [vmem:[#allocation8 + $0x6a0] sm:$0xff]
    %v549 = vld [vmem:[#allocation8 + $0x6a8] sm:$0xff]
    %v550 = vld [vmem:[#allocation8 + $0x6b0] sm:$0xff]
    %v551 = vld [vmem:[#allocation8 + $0x6b8] sm:$0xff]
    %v552 = vld [vmem:[#allocation8 + $0x6c0] sm:$0xff]
    %v553 = vld [vmem:[#allocation8 + $0x6c8] sm:$0xff]
    %v554 = vld [vmem:[#allocation8 + $0x6d0] sm:$0xff]
    %v555 = vld [vmem:[#allocation8 + $0x6d8] sm:$0xff]
    %v556 = vld [vmem:[#allocation8 + $0x6e0] sm:$0xff]
    %v557 = vld [vmem:[#allocation8 + $0x6e8] sm:$0xff]
    %v558 = vld [vmem:[#allocation8 + $0x6f0] sm:$0xff]
    %v559 = vld [vmem:[#allocation8 + $0x6f8] sm:$0xff]
    %v560 = vld [vmem:[#allocation8 + $0x700] sm:$0xff]
    %v561 = vld [vmem:[#allocation8 + $0x708] sm:$0xff]
    %v562 = vld [vmem:[#allocation8 + $0x710] sm:$0xff]
    %v563 = vld [vmem:[#allocation8 + $0x718] sm:$0xff]
    %v564 = vld [vmem:[#allocation8 + $0x720] sm:$0xff]
    %v565 = vld [vmem:[#allocation8 + $0x728] sm:$0xff]
    %v566 = vld [vmem:[#allocation8 + $0x730] sm:$0xff]
    %v567 = vld [vmem:[#allocation8 + $0x738] sm:$0xff]
    %v568 = vld [vmem:[#allocation8 + $0x740] sm:$0xff]
    %v569 = vld [vmem:[#allocation8 + $0x748] sm:$0xff]
    %v570 = vld [vmem:[#allocation8 + $0x750] sm:$0xff]
    %v571 = vld [vmem:[#allocation8 + $0x758] sm:$0xff]
    %v572 = vld [vmem:[#allocation8 + $0x760] sm:$0xff]
    %v573 = vld [vmem:[#allocation8 + $0x768] sm:$0xff]
    %v574 = vld [vmem:[#allocation8 + $0x770] sm:$0xff]
    %v575 = vld [vmem:[#allocation8 + $0x778] sm:$0xff]
    %v576 = vld [vmem:[#allocation8 + $0x780] sm:$0xff]
    %v577 = vld [vmem:[#allocation8 + $0x788] sm:$0xff]
    %v578 = vld [vmem:[#allocation8 + $0x790] sm:$0xff]
    %v579 = vld [vmem:[#allocation8 + $0x798] sm:$0xff]
    %v580 = vld [vmem:[#allocation8 + $0x7a0] sm:$0xff]
    %v581 = vld [vmem:[#allocation8 + $0x7a8] sm:$0xff]
    %v582 = vld [vmem:[#allocation8 + $0x7b0] sm:$0xff]
    %v583 = vld [vmem:[#allocation8 + $0x7b8] sm:$0xff]
    %v584 = vld [vmem:[#allocation8 + $0x7c0] sm:$0xff]
    %v585 = vld [vmem:[#allocation8 + $0x7c8] sm:$0xff]
    %v586 = vld [vmem:[#allocation8 + $0x7d0] sm:$0xff]
    %v587 = vld [vmem:[#allocation8 + $0x7d8] sm:$0xff]
    %v588 = vld [vmem:[#allocation8 + $0x7e0] sm:$0xff]
    %v589 = vld [vmem:[#allocation8 + $0x7e8] sm:$0xff]
    %v590 = vld [vmem:[#allocation8 + $0x7f0] sm:$0xff]
    %v591 = vld [vmem:[#allocation8 + $0x7f8] sm:$0xff]
    %v592 = vld [vmem:[#allocation7] sm:$0xff]
    %v593 = vld [vmem:[%s4] sm:$0x3]
    %v594 = vld [vmem:[#allocation2] sm:$0xff]
    %v595 = vld [vmem:[#allocation2 + $0x8] sm:$0xff]
    %v597 = vperm.slane %v592, 0
    %v598 = vperm.slane %v592, 1
    %v599 = vperm.slane %v592, 2
    %v600 = vperm.slane %v592, 3
    %v601 = vperm.slane %v592, 4
    %v602 = vperm.slane %v592, 5
    %v603 = vperm.slane %v592, 6
    %v604 = vperm.slane %v592, 7
    %613 = vmatpush.msra.mxu0 %v200
    %614 = vmatpush.msra.mxu0 %v192
    %615 = vmatpush.msra.mxu0 %v184
    %616 = vmatpush.msra.mxu0 %v176
    %617 = vmatpush.msra.mxu0 %v168
    %618 = vmatpush.msra.mxu0 %v160
    %619 = vmatpush.msra.mxu0 %v152
    %620 = vmatpush.msra.mxu0 %v144
    %621 = vmatpush.msra.mxu0 %v136
    %622 = vmatpush.msra.mxu0 %v128
    %623 = vmatpush.msra.mxu0 %v120
    %624 = vmatpush.msra.mxu0 %v112
    %625 = vmatpush.msra.mxu0 %v104
    %626 = vmatpush.msra.mxu0 %v96
    %627 = vmatpush.msra.mxu0 %v88
    %628 = vmatpush.msra.mxu0 %v80
    %629 = vmatmul.f32.gmra.mxu0 %v594
    %v630 = vpop.f32.mrf.mxu0
    %v631 = vadd.f32 %v597, %v630
    %632 = vdwg.mxu0
    %633 = vmatpush.msra.mxu0 %v328
    %634 = vmatpush.msra.mxu0 %v320
    %635 = vmatpush.msra.mxu0 %v312
    %636 = vmatpush.msra.mxu0 %v304
    %637 = vmatpush.msra.mxu0 %v296
    %638 = vmatpush.msra.mxu0 %v288
    %639 = vmatpush.msra.mxu0 %v280
    %640 = vmatpush.msra.mxu0 %v272
    %641 = vmatpush.msra.mxu0 %v264
    %642 = vmatpush.msra.mxu0 %v256
    %643 = vmatpush.msra.mxu0 %v248
    %644 = vmatpush.msra.mxu0 %v240
    %645 = vmatpush.msra.mxu0 %v232
    %646 = vmatpush.msra.mxu0 %v224
    %647 = vmatpush.msra.mxu0 %v216
    %648 = vmatpush.msra.mxu0 %v208
    %649 = vmatmul.f32.gmra.mxu0 %v595
    %v650 = vpop.f32.mrf.mxu0
    %v651 = vadd.f32 %v631, %v650
    %652 = vdwg.mxu0
    %653 = vmatpush.msra.mxu0 %v201
    %654 = vmatpush.msra.mxu0 %v193
    %655 = vmatpush.msra.mxu0 %v185
    %656 = vmatpush.msra.mxu0 %v177
    %657 = vmatpush.msra.mxu0 %v169
    %658 = vmatpush.msra.mxu0 %v161
    %659 = vmatpush.msra.mxu0 %v153
    %660 = vmatpush.msra.mxu0 %v145
    %661 = vmatpush.msra.mxu0 %v137
    %662 = vmatpush.msra.mxu0 %v129
    %663 = vmatpush.msra.mxu0 %v121
    %664 = vmatpush.msra.mxu0 %v113
    %665 = vmatpush.msra.mxu0 %v105
    %666 = vmatpush.msra.mxu0 %v97
    %667 = vmatpush.msra.mxu0 %v89
    %668 = vmatpush.msra.mxu0 %v81
    %669 = vmatmul.f32.gmra.mxu0 %v594
    %v670 = vpop.f32.mrf.mxu0
    %v671 = vadd.f32 %v598, %v670
    %672 = vdwg.mxu0
    %673 = vmatpush.msra.mxu0 %v329
    %674 = vmatpush.msra.mxu0 %v321
    %675 = vmatpush.msra.mxu0 %v313
    %676 = vmatpush.msra.mxu0 %v305
    %677 = vmatpush.msra.mxu0 %v297
    %678 = vmatpush.msra.mxu0 %v289
    %679 = vmatpush.msra.mxu0 %v281
    %680 = vmatpush.msra.mxu0 %v273
    %681 = vmatpush.msra.mxu0 %v265
    %682 = vmatpush.msra.mxu0 %v257
    %683 = vmatpush.msra.mxu0 %v249
    %684 = vmatpush.msra.mxu0 %v241
    %685 = vmatpush.msra.mxu0 %v233
    %686 = vmatpush.msra.mxu0 %v225
    %687 = vmatpush.msra.mxu0 %v217
    %688 = vmatpush.msra.mxu0 %v209
    %689 = vmatmul.f32.gmra.mxu0 %v595
    %v690 = vpop.f32.mrf.mxu0
    %v691 = vadd.f32 %v671, %v690
    %692 = vdwg.mxu0
    %693 = vmatpush.msra.mxu0 %v202
    %694 = vmatpush.msra.mxu0 %v194
    %695 = vmatpush.msra.mxu0 %v186
    %696 = vmatpush.msra.mxu0 %v178
    %697 = vmatpush.msra.mxu0 %v170
    %698 = vmatpush.msra.mxu0 %v162
    %699 = vmatpush.msra.mxu0 %v154
    %700 = vmatpush.msra.mxu0 %v146
    %701 = vmatpush.msra.mxu0 %v138
    %702 = vmatpush.msra.mxu0 %v130
    %703 = vmatpush.msra.mxu0 %v122
    %704 = vmatpush.msra.mxu0 %v114
    %705 = vmatpush.msra.mxu0 %v106
    %706 = vmatpush.msra.mxu0 %v98
    %707 = vmatpush.msra.mxu0 %v90
    %708 = vmatpush.msra.mxu0 %v82
    %709 = vmatmul.f32.gmra.mxu0 %v594
    %v710 = vpop.f32.mrf.mxu0
    %v711 = vadd.f32 %v599, %v710
    %712 = vdwg.mxu0
    %713 = vmatpush.msra.mxu0 %v330
    %714 = vmatpush.msra.mxu0 %v322
    %715 = vmatpush.msra.mxu0 %v314
    %716 = vmatpush.msra.mxu0 %v306
    %717 = vmatpush.msra.mxu0 %v298
    %718 = vmatpush.msra.mxu0 %v290
    %719 = vmatpush.msra.mxu0 %v282
    %720 = vmatpush.msra.mxu0 %v274
    %721 = vmatpush.msra.mxu0 %v266
    %722 = vmatpush.msra.mxu0 %v258
    %723 = vmatpush.msra.mxu0 %v250
    %724 = vmatpush.msra.mxu0 %v242
    %725 = vmatpush.msra.mxu0 %v234
    %726 = vmatpush.msra.mxu0 %v226
    %727 = vmatpush.msra.mxu0 %v218
    %728 = vmatpush.msra.mxu0 %v210
    %729 = vmatmul.f32.gmra.mxu0 %v595
    %v730 = vpop.f32.mrf.mxu0
    %v731 = vadd.f32 %v711, %v730
    %732 = vdwg.mxu0
    %733 = vmatpush.msra.mxu0 %v203
    %734 = vmatpush.msra.mxu0 %v195
    %735 = vmatpush.msra.mxu0 %v187
    %736 = vmatpush.msra.mxu0 %v179
    %737 = vmatpush.msra.mxu0 %v171
    %738 = vmatpush.msra.mxu0 %v163
    %739 = vmatpush.msra.mxu0 %v155
    %740 = vmatpush.msra.mxu0 %v147
    %741 = vmatpush.msra.mxu0 %v139
    %742 = vmatpush.msra.mxu0 %v131
    %743 = vmatpush.msra.mxu0 %v123
    %744 = vmatpush.msra.mxu0 %v115
    %745 = vmatpush.msra.mxu0 %v107
    %746 = vmatpush.msra.mxu0 %v99
    %747 = vmatpush.msra.mxu0 %v91
    %748 = vmatpush.msra.mxu0 %v83
    %749 = vmatmul.f32.gmra.mxu0 %v594
    %v750 = vpop.f32.mrf.mxu0
    %v751 = vadd.f32 %v600, %v750
    %752 = vdwg.mxu0
    %753 = vmatpush.msra.mxu0 %v331
    %754 = vmatpush.msra.mxu0 %v323
    %755 = vmatpush.msra.mxu0 %v315
    %756 = vmatpush.msra.mxu0 %v307
    %757 = vmatpush.msra.mxu0 %v299
    %758 = vmatpush.msra.mxu0 %v291
    %759 = vmatpush.msra.mxu0 %v283
    %760 = vmatpush.msra.mxu0 %v275
    %761 = vmatpush.msra.mxu0 %v267
    %762 = vmatpush.msra.mxu0 %v259
    %763 = vmatpush.msra.mxu0 %v251
    %764 = vmatpush.msra.mxu0 %v243
    %765 = vmatpush.msra.mxu0 %v235
    %766 = vmatpush.msra.mxu0 %v227
    %767 = vmatpush.msra.mxu0 %v219
    %768 = vmatpush.msra.mxu0 %v211
    %769 = vmatmul.f32.gmra.mxu0 %v595
    %v770 = vpop.f32.mrf.mxu0
    %v771 = vadd.f32 %v751, %v770
    %772 = vdwg.mxu0
    %773 = vmatpush.msra.mxu0 %v204
    %774 = vmatpush.msra.mxu0 %v196
    %775 = vmatpush.msra.mxu0 %v188
    %776 = vmatpush.msra.mxu0 %v180
    %777 = vmatpush.msra.mxu0 %v172
    %778 = vmatpush.msra.mxu0 %v164
    %779 = vmatpush.msra.mxu0 %v156
    %780 = vmatpush.msra.mxu0 %v148
    %781 = vmatpush.msra.mxu0 %v140
    %782 = vmatpush.msra.mxu0 %v132
    %783 = vmatpush.msra.mxu0 %v124
    %784 = vmatpush.msra.mxu0 %v116
    %785 = vmatpush.msra.mxu0 %v108
    %786 = vmatpush.msra.mxu0 %v100
    %787 = vmatpush.msra.mxu0 %v92
    %788 = vmatpush.msra.mxu0 %v84
    %789 = vmatmul.f32.gmra.mxu0 %v594
    %v790 = vpop.f32.mrf.mxu0
    %v791 = vadd.f32 %v601, %v790
    %792 = vdwg.mxu0
    %793 = vmatpush.msra.mxu0 %v332
    %794 = vmatpush.msra.mxu0 %v324
    %795 = vmatpush.msra.mxu0 %v316
    %796 = vmatpush.msra.mxu0 %v308
    %797 = vmatpush.msra.mxu0 %v300
    %798 = vmatpush.msra.mxu0 %v292
    %799 = vmatpush.msra.mxu0 %v284
    %800 = vmatpush.msra.mxu0 %v276
    %801 = vmatpush.msra.mxu0 %v268
    %802 = vmatpush.msra.mxu0 %v260
    %803 = vmatpush.msra.mxu0 %v252
    %804 = vmatpush.msra.mxu0 %v244
    %805 = vmatpush.msra.mxu0 %v236
    %806 = vmatpush.msra.mxu0 %v228
    %807 = vmatpush.msra.mxu0 %v220
    %808 = vmatpush.msra.mxu0 %v212
    %809 = vmatmul.f32.gmra.mxu0 %v595
    %v810 = vpop.f32.mrf.mxu0
    %v811 = vadd.f32 %v791, %v810
    %812 = vdwg.mxu0
    %813 = vmatpush.msra.mxu0 %v205
    %814 = vmatpush.msra.mxu0 %v197
    %815 = vmatpush.msra.mxu0 %v189
    %816 = vmatpush.msra.mxu0 %v181
    %817 = vmatpush.msra.mxu0 %v173
    %818 = vmatpush.msra.mxu0 %v165
    %819 = vmatpush.msra.mxu0 %v157
    %820 = vmatpush.msra.mxu0 %v149
    %821 = vmatpush.msra.mxu0 %v141
    %822 = vmatpush.msra.mxu0 %v133
    %823 = vmatpush.msra.mxu0 %v125
    %824 = vmatpush.msra.mxu0 %v117
    %825 = vmatpush.msra.mxu0 %v109
    %826 = vmatpush.msra.mxu0 %v101
    %827 = vmatpush.msra.mxu0 %v93
    %828 = vmatpush.msra.mxu0 %v85
    %829 = vmatmul.f32.gmra.mxu0 %v594
    %v830 = vpop.f32.mrf.mxu0
    %v831 = vadd.f32 %v602, %v830
    %832 = vdwg.mxu0
    %833 = vmatpush.msra.mxu0 %v333
    %834 = vmatpush.msra.mxu0 %v325
    %835 = vmatpush.msra.mxu0 %v317
    %836 = vmatpush.msra.mxu0 %v309
    %837 = vmatpush.msra.mxu0 %v301
    %838 = vmatpush.msra.mxu0 %v293
    %839 = vmatpush.msra.mxu0 %v285
    %840 = vmatpush.msra.mxu0 %v277
    %841 = vmatpush.msra.mxu0 %v269
    %842 = vmatpush.msra.mxu0 %v261
    %843 = vmatpush.msra.mxu0 %v253
    %844 = vmatpush.msra.mxu0 %v245
    %845 = vmatpush.msra.mxu0 %v237
    %846 = vmatpush.msra.mxu0 %v229
    %847 = vmatpush.msra.mxu0 %v221
    %848 = vmatpush.msra.mxu0 %v213
    %849 = vmatmul.f32.gmra.mxu0 %v595
    %v850 = vpop.f32.mrf.mxu0
    %v851 = vadd.f32 %v831, %v850
    %852 = vdwg.mxu0
    %853 = vmatpush.msra.mxu0 %v206
    %854 = vmatpush.msra.mxu0 %v198
    %855 = vmatpush.msra.mxu0 %v190
    %856 = vmatpush.msra.mxu0 %v182
    %857 = vmatpush.msra.mxu0 %v174
    %858 = vmatpush.msra.mxu0 %v166
    %859 = vmatpush.msra.mxu0 %v158
    %860 = vmatpush.msra.mxu0 %v150
    %861 = vmatpush.msra.mxu0 %v142
    %862 = vmatpush.msra.mxu0 %v134
    %863 = vmatpush.msra.mxu0 %v126
    %864 = vmatpush.msra.mxu0 %v118
    %865 = vmatpush.msra.mxu0 %v110
    %866 = vmatpush.msra.mxu0 %v102
    %867 = vmatpush.msra.mxu0 %v94
    %868 = vmatpush.msra.mxu0 %v86
    %869 = vmatmul.f32.gmra.mxu0 %v594
    %v870 = vpop.f32.mrf.mxu0
    %v871 = vadd.f32 %v603, %v870
    %872 = vdwg.mxu0
    %873 = vmatpush.msra.mxu0 %v334
    %874 = vmatpush.msra.mxu0 %v326
    %875 = vmatpush.msra.mxu0 %v318
    %876 = vmatpush.msra.mxu0 %v310
    %877 = vmatpush.msra.mxu0 %v302
    %878 = vmatpush.msra.mxu0 %v294
    %879 = vmatpush.msra.mxu0 %v286
    %880 = vmatpush.msra.mxu0 %v278
    %881 = vmatpush.msra.mxu0 %v270
    %882 = vmatpush.msra.mxu0 %v262
    %883 = vmatpush.msra.mxu0 %v254
    %884 = vmatpush.msra.mxu0 %v246
    %885 = vmatpush.msra.mxu0 %v238
    %886 = vmatpush.msra.mxu0 %v230
    %887 = vmatpush.msra.mxu0 %v222
    %888 = vmatpush.msra.mxu0 %v214
    %889 = vmatmul.f32.gmra.mxu0 %v595
    %v890 = vpop.f32.mrf.mxu0
    %v891 = vadd.f32 %v871, %v890
    %892 = vdwg.mxu0
    %893 = vmatpush.msra.mxu0 %v207
    %894 = vmatpush.msra.mxu0 %v199
    %895 = vmatpush.msra.mxu0 %v191
    %896 = vmatpush.msra.mxu0 %v183
    %897 = vmatpush.msra.mxu0 %v175
    %898 = vmatpush.msra.mxu0 %v167
    %899 = vmatpush.msra.mxu0 %v159
    %900 = vmatpush.msra.mxu0 %v151
    %901 = vmatpush.msra.mxu0 %v143
    %902 = vmatpush.msra.mxu0 %v135
    %903 = vmatpush.msra.mxu0 %v127
    %904 = vmatpush.msra.mxu0 %v119
    %905 = vmatpush.msra.mxu0 %v111
    %906 = vmatpush.msra.mxu0 %v103
    %907 = vmatpush.msra.mxu0 %v95
    %908 = vmatpush.msra.mxu0 %v87
    %909 = vmatmul.f32.gmra.mxu0 %v594
    %v910 = vpop.f32.mrf.mxu0
    %v911 = vadd.f32 %v604, %v910
    %912 = vdwg.mxu0
    %913 = vmatpush.msra.mxu0 %v335
    %914 = vmatpush.msra.mxu0 %v327
    %915 = vmatpush.msra.mxu0 %v319
    %916 = vmatpush.msra.mxu0 %v311
    %917 = vmatpush.msra.mxu0 %v303
    %918 = vmatpush.msra.mxu0 %v295
    %919 = vmatpush.msra.mxu0 %v287
    %920 = vmatpush.msra.mxu0 %v279
    %921 = vmatpush.msra.mxu0 %v271
    %922 = vmatpush.msra.mxu0 %v263
    %923 = vmatpush.msra.mxu0 %v255
    %924 = vmatpush.msra.mxu0 %v247
    %925 = vmatpush.msra.mxu0 %v239
    %926 = vmatpush.msra.mxu0 %v231
    %927 = vmatpush.msra.mxu0 %v223
    %928 = vmatpush.msra.mxu0 %v215
    %929 = vmatmul.f32.gmra.mxu0 %v595
    %v930 = vpop.f32.mrf.mxu0
    %v931 = vadd.f32 %v911, %v930
    %932 = vdwg.mxu0
    %v933 = vmul.f32 %v651, %v651
    %v934 = vmul.f32 %v691, %v691
    %v935 = vmul.f32 %v731, %v731
    %v936 = vmul.f32 %v771, %v771
    %v937 = vmul.f32 %v811, %v811
    %v938 = vmul.f32 %v851, %v851
    %v939 = vmul.f32 %v891, %v891
    %v940 = vmul.f32 %v931, %v931
    %v941 = vmul.f32 %v933, 0.044715
    %v942 = vmul.f32 %v934, 0.044715
    %v943 = vmul.f32 %v935, 0.044715
    %v944 = vmul.f32 %v936, 0.044715
    %v945 = vmul.f32 %v937, 0.044715
    %v946 = vmul.f32 %v938, 0.044715
    %v947 = vmul.f32 %v939, 0.044715
    %v948 = vmul.f32 %v940, 0.044715
    %v949 = vadd.f32 %v941, 1.0
    %v950 = vadd.f32 %v942, 1.0
    %v951 = vadd.f32 %v943, 1.0
    %v952 = vadd.f32 %v944, 1.0
    %v953 = vadd.f32 %v945, 1.0
    %v954 = vadd.f32 %v946, 1.0
    %v955 = vadd.f32 %v947, 1.0
    %v956 = vadd.f32 %v948, 1.0
    %v957 = vmul.f32 %v651, %v949
    %v958 = vmul.f32 %v691, %v950
    %v959 = vmul.f32 %v731, %v951
    %v960 = vmul.f32 %v771, %v952
    %v961 = vmul.f32 %v811, %v953
    %v962 = vmul.f32 %v851, %v954
    %v963 = vmul.f32 %v891, %v955
    %v964 = vmul.f32 %v931, %v956
    %v965 = vmul.f32 %v957, 0.7978846
    %v966 = vmul.f32 %v958, 0.7978846
    %v967 = vmul.f32 %v959, 0.7978846
    %v968 = vmul.f32 %v960, 0.7978846
    %v969 = vmul.f32 %v961, 0.7978846
    %v970 = vmul.f32 %v962, 0.7978846
    %v971 = vmul.f32 %v963, 0.7978846
    %v972 = vmul.f32 %v964, 0.7978846
    %v973 = vtanh.pop %v965
    %v974 = vtanh.pop %v966
    %v975 = vtanh.pop %v967
    %v976 = vtanh.pop %v968
    %v977 = vtanh.pop %v969
    %v978 = vtanh.pop %v970
    %v979 = vtanh.pop %v971
    %v980 = vtanh.pop %v972
    %v981 = vmul.f32 %v651, 0.5
    %v982 = vmul.f32 %v691, 0.5
    %v983 = vmul.f32 %v731, 0.5
    %v984 = vmul.f32 %v771, 0.5
    %v985 = vmul.f32 %v811, 0.5
    %v986 = vmul.f32 %v851, 0.5
    %v987 = vmul.f32 %v891, 0.5
    %v988 = vmul.f32 %v931, 0.5
    %v989 = vmul.f32 %v981, %v973
    %v990 = vmul.f32 %v982, %v974
    %v991 = vmul.f32 %v983, %v975
    %v992 = vmul.f32 %v984, %v976
    %v993 = vmul.f32 %v985, %v977
    %v994 = vmul.f32 %v986, %v978
    %v995 = vmul.f32 %v987, %v979
    %v996 = vmul.f32 %v988, %v980
    %v997 = vadd.f32 %v981, %v989
    %v998 = vadd.f32 %v982, %v990
    %v999 = vadd.f32 %v983, %v991
    %v1000 = vadd.f32 %v984, %v992
    %v1001 = vadd.f32 %v985, %v993
    %v1002 = vadd.f32 %v986, %v994
    %v1003 = vadd.f32 %v987, %v995
    %v1004 = vadd.f32 %v988, %v996
    %v1006 = vperm.slane %v593, 0
    %v1007 = vperm.slane %v593, 1
    %1010 = vmatpush.msra.mxu0 %v366
    %1011 = vmatpush.msra.mxu0 %v364
    %1012 = vmatpush.msra.mxu0 %v362
    %1013 = vmatpush.msra.mxu0 %v360
    %1014 = vmatpush.msra.mxu0 %v358
    %1015 = vmatpush.msra.mxu0 %v356
    %1016 = vmatpush.msra.mxu0 %v354
    %1017 = vmatpush.msra.mxu0 %v352
    %1018 = vmatpush.msra.mxu0 %v350
    %1019 = vmatpush.msra.mxu0 %v348
    %1020 = vmatpush.msra.mxu0 %v346
    %1021 = vmatpush.msra.mxu0 %v344
    %1022 = vmatpush.msra.mxu0 %v342
    %1023 = vmatpush.msra.mxu0 %v340
    %1024 = vmatpush.msra.mxu0 %v338
    %1025 = vmatpush.msra.mxu0 %v336
    %1026 = vmatmul.f32.gmra.mxu0 %v997
    %v1027 = vpop.f32.mrf.mxu0
    %v1028 = vadd.f32 %v1006, %v1027
    %1029 = vdwg.mxu0
    %1030 = vmatpush.msra.mxu0 %v398
    %1031 = vmatpush.msra.mxu0 %v396
    %1032 = vmatpush.msra.mxu0 %v394
    %1033 = vmatpush.msra.mxu0 %v392
    %1034 = vmatpush.msra.mxu0 %v390
    %1035 = vmatpush.msra.mxu0 %v388
    %1036 = vmatpush.msra.mxu0 %v386
    %1037 = vmatpush.msra.mxu0 %v384
    %1038 = vmatpush.msra.mxu0 %v382
    %1039 = vmatpush.msra.mxu0 %v380
    %1040 = vmatpush.msra.mxu0 %v378
    %1041 = vmatpush.msra.mxu0 %v376
    %1042 = vmatpush.msra.mxu0 %v374
    %1043 = vmatpush.msra.mxu0 %v372
    %1044 = vmatpush.msra.mxu0 %v370
    %1045 = vmatpush.msra.mxu0 %v368
    %1046 = vmatmul.f32.gmra.mxu0 %v998
    %v1047 = vpop.f32.mrf.mxu0
    %v1048 = vadd.f32 %v1028, %v1047
    %1049 = vdwg.mxu0
    %1050 = vmatpush.msra.mxu0 %v430
    %1051 = vmatpush.msra.mxu0 %v428
    %1052 = vmatpush.msra.mxu0 %v426
    %1053 = vmatpush.msra.mxu0 %v424
    %1054 = vmatpush.msra.mxu0 %v422
    %1055 = vmatpush.msra.mxu0 %v420
    %1056 = vmatpush.msra.mxu0 %v418
    %1057 = vmatpush.msra.mxu0 %v416
    %1058 = vmatpush.msra.mxu0 %v414
    %1059 = vmatpush.msra.mxu0 %v412
    %1060 = vmatpush.msra.mxu0 %v410
    %1061 = vmatpush.msra.mxu0 %v408
    %1062 = vmatpush.msra.mxu0 %v406
    %1063 = vmatpush.msra.mxu0 %v404
    %1064 = vmatpush.msra.mxu0 %v402
    %1065 = vmatpush.msra.mxu0 %v400
    %1066 = vmatmul.f32.gmra.mxu0 %v999
    %v1067 = vpop.f32.mrf.mxu0
    %v1068 = vadd.f32 %v1048, %v1067
    %1069 = vdwg.mxu0
    %1070 = vmatpush.msra.mxu0 %v462
    %1071 = vmatpush.msra.mxu0 %v460
    %1072 = vmatpush.msra.mxu0 %v458
    %1073 = vmatpush.msra.mxu0 %v456
    %1074 = vmatpush.msra.mxu0 %v454
    %1075 = vmatpush.msra.mxu0 %v452
    %1076 = vmatpush.msra.mxu0 %v450
    %1077 = vmatpush.msra.mxu0 %v448
    %1078 = vmatpush.msra.mxu0 %v446
    %1079 = vmatpush.msra.mxu0 %v444
    %1080 = vmatpush.msra.mxu0 %v442
    %1081 = vmatpush.msra.mxu0 %v440
    %1082 = vmatpush.msra.mxu0 %v438
    %1083 = vmatpush.msra.mxu0 %v436
    %1084 = vmatpush.msra.mxu0 %v434
    %1085 = vmatpush.msra.mxu0 %v432
    %1086 = vmatmul.f32.gmra.mxu0 %v1000
    %v1087 = vpop.f32.mrf.mxu0
    %v1088 = vadd.f32 %v1068, %v1087
    %1089 = vdwg.mxu0
    %1090 = vmatpush.msra.mxu0 %v494
    %1091 = vmatpush.msra.mxu0 %v492
    %1092 = vmatpush.msra.mxu0 %v490
    %1093 = vmatpush.msra.mxu0 %v488
    %1094 = vmatpush.msra.mxu0 %v486
    %1095 = vmatpush.msra.mxu0 %v484
    %1096 = vmatpush.msra.mxu0 %v482
    %1097 = vmatpush.msra.mxu0 %v480
    %1098 = vmatpush.msra.mxu0 %v478
    %1099 = vmatpush.msra.mxu0 %v476
    %1100 = vmatpush.msra.mxu0 %v474
    %1101 = vmatpush.msra.mxu0 %v472
    %1102 = vmatpush.msra.mxu0 %v470
    %1103 = vmatpush.msra.mxu0 %v468
    %1104 = vmatpush.msra.mxu0 %v466
    %1105 = vmatpush.msra.mxu0 %v464
    %1106 = vmatmul.f32.gmra.mxu0 %v1001
    %v1107 = vpop.f32.mrf.mxu0
    %v1108 = vadd.f32 %v1088, %v1107
    %1109 = vdwg.mxu0
    %1110 = vmatpush.msra.mxu0 %v526
    %1111 = vmatpush.msra.mxu0 %v524
    %1112 = vmatpush.msra.mxu0 %v522
    %1113 = vmatpush.msra.mxu0 %v520
    %1114 = vmatpush.msra.mxu0 %v518
    %1115 = vmatpush.msra.mxu0 %v516
    %1116 = vmatpush.msra.mxu0 %v514
    %1117 = vmatpush.msra.mxu0 %v512
    %1118 = vmatpush.msra.mxu0 %v510
    %1119 = vmatpush.msra.mxu0 %v508
    %1120 = vmatpush.msra.mxu0 %v506
    %1121 = vmatpush.msra.mxu0 %v504
    %1122 = vmatpush.msra.mxu0 %v502
    %1123 = vmatpush.msra.mxu0 %v500
    %1124 = vmatpush.msra.mxu0 %v498
    %1125 = vmatpush.msra.mxu0 %v496
    %1126 = vmatmul.f32.gmra.mxu0 %v1002
    %v1127 = vpop.f32.mrf.mxu0
    %v1128 = vadd.f32 %v1108, %v1127
    %1129 = vdwg.mxu0
    %1130 = vmatpush.msra.mxu0 %v558
    %1131 = vmatpush.msra.mxu0 %v556
    %1132 = vmatpush.msra.mxu0 %v554
    %1133 = vmatpush.msra.mxu0 %v552
    %1134 = vmatpush.msra.mxu0 %v550
    %1135 = vmatpush.msra.mxu0 %v548
    %1136 = vmatpush.msra.mxu0 %v546
    %1137 = vmatpush.msra.mxu0 %v544
    %1138 = vmatpush.msra.mxu0 %v542
    %1139 = vmatpush.msra.mxu0 %v540
    %1140 = vmatpush.msra.mxu0 %v538
    %1141 = vmatpush.msra.mxu0 %v536
    %1142 = vmatpush.msra.mxu0 %v534
    %1143 = vmatpush.msra.mxu0 %v532
    %1144 = vmatpush.msra.mxu0 %v530
    %1145 = vmatpush.msra.mxu0 %v528
    %1146 = vmatmul.f32.gmra.mxu0 %v1003
    %v1147 = vpop.f32.mrf.mxu0
    %v1148 = vadd.f32 %v1128, %v1147
    %1149 = vdwg.mxu0
    %1150 = vmatpush.msra.mxu0 %v590
    %1151 = vmatpush.msra.mxu0 %v588
    %1152 = vmatpush.msra.mxu0 %v586
    %1153 = vmatpush.msra.mxu0 %v584
    %1154 = vmatpush.msra.mxu0 %v582
    %1155 = vmatpush.msra.mxu0 %v580
    %1156 = vmatpush.msra.mxu0 %v578
    %1157 = vmatpush.msra.mxu0 %v576
    %1158 = vmatpush.msra.mxu0 %v574
    %1159 = vmatpush.msra.mxu0 %v572
    %1160 = vmatpush.msra.mxu0 %v570
    %1161 = vmatpush.msra.mxu0 %v568
    %1162 = vmatpush.msra.mxu0 %v566
    %1163 = vmatpush.msra.mxu0 %v564
    %1164 = vmatpush.msra.mxu0 %v562
    %1165 = vmatpush.msra.mxu0 %v560
    %1166 = vmatmul.f32.gmra.mxu0 %v1004
    %v1167 = vpop.f32.mrf.mxu0
    %v1168 = vadd.f32 %v1148, %v1167
    %1169 = vdwg.mxu0
    %1170 = vmatpush.msra.mxu0 %v367
    %1171 = vmatpush.msra.mxu0 %v365
    %1172 = vmatpush.msra.mxu0 %v363
    %1173 = vmatpush.msra.mxu0 %v361
    %1174 = vmatpush.msra.mxu0 %v359
    %1175 = vmatpush.msra.mxu0 %v357
    %1176 = vmatpush.msra.mxu0 %v355
    %1177 = vmatpush.msra.mxu0 %v353
    %1178 = vmatpush.msra.mxu0 %v351
    %1179 = vmatpush.msra.mxu0 %v349
    %1180 = vmatpush.msra.mxu0 %v347
    %1181 = vmatpush.msra.mxu0 %v345
    %1182 = vmatpush.msra.mxu0 %v343
    %1183 = vmatpush.msra.mxu0 %v341
    %1184 = vmatpush.msra.mxu0 %v339
    %1185 = vmatpush.msra.mxu0 %v337
    %1186 = vmatmul.f32.gmra.mxu0 %v997
    %v1187 = vpop.f32.mrf.mxu0
    %v1188 = vadd.f32 %v1007, %v1187
    %1189 = vdwg.mxu0
    %1190 = vmatpush.msra.mxu0 %v399
    %1191 = vmatpush.msra.mxu0 %v397
    %1192 = vmatpush.msra.mxu0 %v395
    %1193 = vmatpush.msra.mxu0 %v393
    %1194 = vmatpush.msra.mxu0 %v391
    %1195 = vmatpush.msra.mxu0 %v389
    %1196 = vmatpush.msra.mxu0 %v387
    %1197 = vmatpush.msra.mxu0 %v385
    %1198 = vmatpush.msra.mxu0 %v383
    %1199 = vmatpush.msra.mxu0 %v381
    %1200 = vmatpush.msra.mxu0 %v379
    %1201 = vmatpush.msra.mxu0 %v377
    %1202 = vmatpush.msra.mxu0 %v375
    %1203 = vmatpush.msra.mxu0 %v373
    %1204 = vmatpush.msra.mxu0 %v371
    %1205 = vmatpush.msra.mxu0 %v369
    %1206 = vmatmul.f32.gmra.mxu0 %v998
    %v1207 = vpop.f32.mrf.mxu0
    %v1208 = vadd.f32 %v1188, %v1207
    %1209 = vdwg.mxu0
    %1210 = vmatpush.msra.mxu0 %v431
    %1211 = vmatpush.msra.mxu0 %v429
    %1212 = vmatpush.msra.mxu0 %v427
    %1213 = vmatpush.msra.mxu0 %v425
    %1214 = vmatpush.msra.mxu0 %v423
    %1215 = vmatpush.msra.mxu0 %v421
    %1216 = vmatpush.msra.mxu0 %v419
    %1217 = vmatpush.msra.mxu0 %v417
    %1218 = vmatpush.msra.mxu0 %v415
    %1219 = vmatpush.msra.mxu0 %v413
    %1220 = vmatpush.msra.mxu0 %v411
    %1221 = vmatpush.msra.mxu0 %v409
    %1222 = vmatpush.msra.mxu0 %v407
    %1223 = vmatpush.msra.mxu0 %v405
    %1224 = vmatpush.msra.mxu0 %v403
    %1225 = vmatpush.msra.mxu0 %v401
    %1226 = vmatmul.f32.gmra.mxu0 %v999
    %v1227 = vpop.f32.mrf.mxu0
    %v1228 = vadd.f32 %v1208, %v1227
    %1229 = vdwg.mxu0
    %1230 = vmatpush.msra.mxu0 %v463
    %1231 = vmatpush.msra.mxu0 %v461
    %1232 = vmatpush.msra.mxu0 %v459
    %1233 = vmatpush.msra.mxu0 %v457
    %1234 = vmatpush.msra.mxu0 %v455
    %1235 = vmatpush.msra.mxu0 %v453
    %1236 = vmatpush.msra.mxu0 %v451
    %1237 = vmatpush.msra.mxu0 %v449
    %1238 = vmatpush.msra.mxu0 %v447
    %1239 = vmatpush.msra.mxu0 %v445
    %1240 = vmatpush.msra.mxu0 %v443
    %1241 = vmatpush.msra.mxu0 %v441
    %1242 = vmatpush.msra.mxu0 %v439
    %1243 = vmatpush.msra.mxu0 %v437
    %1244 = vmatpush.msra.mxu0 %v435
    %1245 = vmatpush.msra.mxu0 %v433
    %1246 = vmatmul.f32.gmra.mxu0 %v1000
    %v1247 = vpop.f32.mrf.mxu0
    %v1248 = vadd.f32 %v1228, %v1247
    %1249 = vdwg.mxu0
    %1250 = vmatpush.msra.mxu0 %v495
    %1251 = vmatpush.msra.mxu0 %v493
    %1252 = vmatpush.msra.mxu0 %v491
    %1253 = vmatpush.msra.mxu0 %v489
    %1254 = vmatpush.msra.mxu0 %v487
    %1255 = vmatpush.msra.mxu0 %v485
    %1256 = vmatpush.msra.mxu0 %v483
    %1257 = vmatpush.msra.mxu0 %v481
    %1258 = vmatpush.msra.mxu0 %v479
    %1259 = vmatpush.msra.mxu0 %v477
    %1260 = vmatpush.msra.mxu0 %v475
    %1261 = vmatpush.msra.mxu0 %v473
    %1262 = vmatpush.msra.mxu0 %v471
    %1263 = vmatpush.msra.mxu0 %v469
    %1264 = vmatpush.msra.mxu0 %v467
    %1265 = vmatpush.msra.mxu0 %v465
    %1266 = vmatmul.f32.gmra.mxu0 %v1001
    %v1267 = vpop.f32.mrf.mxu0
    %v1268 = vadd.f32 %v1248, %v1267
    %1269 = vdwg.mxu0
    %1270 = vmatpush.msra.mxu0 %v527
    %1271 = vmatpush.msra.mxu0 %v525
    %1272 = vmatpush.msra.mxu0 %v523
    %1273 = vmatpush.msra.mxu0 %v521
    %1274 = vmatpush.msra.mxu0 %v519
    %1275 = vmatpush.msra.mxu0 %v517
    %1276 = vmatpush.msra.mxu0 %v515
    %1277 = vmatpush.msra.mxu0 %v513
    %1278 = vmatpush.msra.mxu0 %v511
    %1279 = vmatpush.msra.mxu0 %v509
    %1280 = vmatpush.msra.mxu0 %v507
    %1281 = vmatpush.msra.mxu0 %v505
    %1282 = vmatpush.msra.mxu0 %v503
    %1283 = vmatpush.msra.mxu0 %v501
    %1284 = vmatpush.msra.mxu0 %v499
    %1285 = vmatpush.msra.mxu0 %v497
    %1286 = vmatmul.f32.gmra.mxu0 %v1002
    %v1287 = vpop.f32.mrf.mxu0
    %v1288 = vadd.f32 %v1268, %v1287
    %1289 = vdwg.mxu0
    %1290 = vmatpush.msra.mxu0 %v559
    %1291 = vmatpush.msra.mxu0 %v557
    %1292 = vmatpush.msra.mxu0 %v555
    %1293 = vmatpush.msra.mxu0 %v553
    %1294 = vmatpush.msra.mxu0 %v551
    %1295 = vmatpush.msra.mxu0 %v549
    %1296 = vmatpush.msra.mxu0 %v547
    %1297 = vmatpush.msra.mxu0 %v545
    %1298 = vmatpush.msra.mxu0 %v543
    %1299 = vmatpush.msra.mxu0 %v541
    %1300 = vmatpush.msra.mxu0 %v539
    %1301 = vmatpush.msra.mxu0 %v537
    %1302 = vmatpush.msra.mxu0 %v535
    %1303 = vmatpush.msra.mxu0 %v533
    %1304 = vmatpush.msra.mxu0 %v531
    %1305 = vmatpush.msra.mxu0 %v529
    %1306 = vmatmul.f32.gmra.mxu0 %v1003
    %v1307 = vpop.f32.mrf.mxu0
    %v1308 = vadd.f32 %v1288, %v1307
    %1309 = vdwg.mxu0
    %1310 = vmatpush.msra.mxu0 %v591
    %1311 = vmatpush.msra.mxu0 %v589
    %1312 = vmatpush.msra.mxu0 %v587
    %1313 = vmatpush.msra.mxu0 %v585
    %1314 = vmatpush.msra.mxu0 %v583
    %1315 = vmatpush.msra.mxu0 %v581
    %1316 = vmatpush.msra.mxu0 %v579
    %1317 = vmatpush.msra.mxu0 %v577
    %1318 = vmatpush.msra.mxu0 %v575
    %1319 = vmatpush.msra.mxu0 %v573
    %1320 = vmatpush.msra.mxu0 %v571
    %1321 = vmatpush.msra.mxu0 %v569
    %1322 = vmatpush.msra.mxu0 %v567
    %1323 = vmatpush.msra.mxu0 %v565
    %1324 = vmatpush.msra.mxu0 %v563
    %1325 = vmatpush.msra.mxu0 %v561
    %1326 = vmatmul.f32.gmra.mxu0 %v1004
    %v1327 = vpop.f32.mrf.mxu0
    %v1328 = vadd.f32 %v1308, %v1327
    %1329 = vdwg.mxu0
    %1330 = vst [vmem:[#allocation10] sm:$0xff] %v1168
    %1331 = vst [vmem:[#allocation10 + $0x8] sm:$0xff] %v1328
    // Predicated region
    $region38: #{tpu_custom_call.1} parent=1 // pred_check
      _
    $region39: #{tpu_custom_call.1} parent=1 // pred_check_branch
      %1333 = sbr.rel (0) target = $region41
    $region40: #{tpu_custom_call.1} parent=1 // pred_region
      %1335 = vsyncadd [#allocation4], 0
      %s1337 = sshll.u32 [#allocation10], 4
      %s1338 = int_to_ptr.vmem [resolvable:$true] %s1337
      %s1339 = sshll.u32 %s5, 4
      %s1340 = int_to_ptr.hbm [resolvable:$true] %s1339
      %1342 = dma.vmem_to_hbm [thread:$0]  %s1338, 256, %s1340, [#allocation4]
    $region41: #{tpu_custom_call.1} parent=1 // pred_fallthru
      _
    // Predicated region
    $region42: #{tpu_custom_call.1} parent=1 // pred_check
      _
    $region43: #{tpu_custom_call.1} parent=1 // pred_check_branch
      %1344 = sbr.rel (0) target = $region45
    $region44: #{tpu_custom_call.1} parent=1 // pred_region
      %1346 = dma.done [#allocation4], 256
    $region45: #{tpu_custom_call.1} parent=1 // pred_fallthru
      _
    %1347 = vsyncpa [#allocation3], 1
    %1348 = vsyncpa [#allocation6], 1
    %1349 = vsyncpa [#allocation9], 1
    %1350 = vsyncpa [#allocation4], 1

</llo_original>
